<compile_context>
chip_gen: v6e
topology: v6e:2x2x1
jax: 0.10.0
libtpu: 0.0.40
codegen_flags: <defaults>
</compile_context>

<pallas_src>
import functools

import numpy as np
import jax
import jax.numpy as jnp
from jax.experimental import pallas as pl
from jax.experimental.pallas import tpu as pltpu

F32 = jnp.float32
BF16 = jnp.bfloat16


def _round_up(x, m):
    return ((x + m - 1) // m) * m


def _full_spec(a):
    # whole-array block, broadcast across the (1-D) grid
    return pl.BlockSpec(a.shape, lambda i, _nd=a.ndim: (0,) * _nd)


# --------------------------------------------------------------------------------------
# PointNetfeat (global_feat, no transforms), batched over all parts + per-part max pool.
# --------------------------------------------------------------------------------------
def pointnet_pool_kernel(x_ref, w1, b1, w2, b2, w3, b3, out_ref, *, tb, p):
    x = x_ref[...]                                                        # (tb*P, 6) bf16
    h = jnp.dot(x, w1[...], preferred_element_type=F32) + b1[...]
    h = jnp.maximum(h, 0.0)                                               # relu(bn1(conv1))
    h = jnp.dot(h.astype(BF16), w2[...], preferred_element_type=F32) + b2[...]
    h = jnp.maximum(h, 0.0)                                               # relu(bn2(conv2))
    h = jnp.dot(h.astype(BF16), w3[...], preferred_element_type=F32) + b3[...]  # bn3(conv3)
    # per-part max pool: one fused sublane reduce instead of tb slice+concat copies
    out_ref[...] = jnp.max(h.reshape(tb, p, h.shape[-1]), axis=1)         # (tb, 256)


def pointnet_pool(pcls, params, tb_max=32):
    N, P, C = pcls.shape
    tb = min(tb_max, _round_up(N, 8))          # keep >=2 grid steps for realistic N
    n_tot = _round_up(N, tb)
    x = pcls.astype(BF16)                      # bf16 on the DMA path; MXU consumes bf16
    if n_tot != N:
        x = jnp.pad(x, ((0, n_tot - N), (0, 0), (0, 0)))
    x_flat = x.reshape(n_tot * P, C)           # free XLA reshape
    f_out = params[4].shape[1]
    kern = functools.partial(pointnet_pool_kernel, tb=tb, p=P)
    pooled = pl.pallas_call(
        kern,
        out_shape=jax.ShapeDtypeStruct((n_tot, f_out), F32),
        grid=(n_tot // tb,),
        in_specs=[pl.BlockSpec((tb * P, C), lambda i: (i, 0))] + [_full_spec(a) for a in params],
        out_specs=pl.BlockSpec((tb, f_out), lambda i: (i, 0)),
        compiler_params=pltpu.CompilerParams(
            dimension_semantics=("parallel",),
            vmem_limit_bytes=32 * 1024 * 1024),
    )(x_flat, *params)
    return pooled[:N]                                                     # (N, 256)


# --------------------------------------------------------------------------------------
# Fused object_embedding + MultiGAT as dense masked attention; x and adj stay in VMEM.
# adj[dst, src] = #edges(src->dst) (+1 on the diagonal for the self-loop), stored bf16.
# --------------------------------------------------------------------------------------
def gnn_kernel(*refs, layer_dims):
    pooled_ref, adj_ref, we_ref, be_ref = refs[:4]
    out_ref = refs[-1]
    layer_refs = refs[4:-1]

    # object_embedding, batched over all parts: (N,256) @ (256,256) + b
    x = jnp.dot(pooled_ref[...].astype(BF16), we_ref[...],
                preferred_element_type=F32) + be_ref[...]

    adj = adj_ref[...].astype(F32)                                        # (N, N)
    mask = adj > 0.0
    neg = jnp.float32(-1e30)
    num_layers = len(layer_dims)

    for li, (heads, f_out) in enumerate(layer_dims):
        w_ref, asrcblk_ref, adst_ref, b_ref = layer_refs[4 * li:4 * li + 4]
        last = li == num_layers - 1
        h = jnp.dot(x.astype(BF16), w_ref[...], preferred_element_type=F32)   # (N, H*Fout)
        # all-head "source" attention coefficients in ONE small matmul:
        # asrcblk is (H, H*Fout) block-diagonal -> e_src_all (H, N)
        e_src_all = jax.lax.dot_general(asrcblk_ref[...], h, (((1,), (1,)), ((), ())),
                                        preferred_element_type=F32)
        head_outs = []
        for hd in range(heads):
            hh = h[:, hd * f_out:(hd + 1) * f_out]                        # (N, Fout)
            e_dst = jnp.sum(hh * adst_ref[hd:hd + 1, :], axis=-1, keepdims=True)  # VPU, (N,1)
            e_src = e_src_all[hd:hd + 1, :]                               # (1, N)
            logit = e_dst + e_src                                         # (N_dst, N_src)
            logit = jnp.where(logit > 0, logit, 0.2 * logit)              # LeakyReLU(0.2)
            masked = jnp.where(mask, logit, neg)
            m = jnp.max(masked, axis=-1, keepdims=True)
            p_un = adj * jnp.exp(masked - m)                              # multiplicity-aware
            inv = pl.reciprocal(jnp.sum(p_un, axis=-1, keepdims=True))    # exact reciprocal
            alpha = p_un * inv
            head_out = jnp.dot(alpha.astype(BF16), hh.astype(BF16),
                               preferred_element_type=F32)                # (N, Fout)
            head_out = head_out + b_ref[:, hd * f_out:(hd + 1) * f_out]
            if last:
                out_ref[:, hd * f_out:(hd + 1) * f_out] = head_out.astype(out_ref.dtype)
            else:                                                         # ELU between layers
                head_out = jnp.where(head_out > 0, head_out,
                                     jnp.exp(jnp.minimum(head_out, 0.0)) - 1.0)
                head_outs.append(head_out)
        if not last:
            x = jnp.concatenate(head_outs, axis=-1)                       # stays in VMEM


def gnn_forward(pooled, adj, embed_params, gat_params):
    # NOTE: whole-graph (grid-less) kernel; fine for typical part counts of this module.
    # TODO(synk): for v7x (2 TCs, 64 MiB VMEM) row-tile adj over destination rows with a
    # "parallel" grid axis to use both cores and bound VMEM for very large graphs.
    N = pooled.shape[0]
    we, be = embed_params
    layer_dims = tuple((a_d.shape[0], a_d.shape[1]) for (_, _, a_d, _) in gat_params)
    out_dim = layer_dims[-1][0] * layer_dims[-1][1]
    flat_layers = [p for layer in gat_params for p in layer]
    kern = functools.partial(gnn_kernel, layer_dims=layer_dims)
    vmem = lambda: pl.BlockSpec(memory_space=pltpu.MemorySpace.VMEM)
    n_in = 4 + len(flat_layers)
    return pl.pallas_call(
        kern,
        out_shape=jax.ShapeDtypeStruct((N, out_dim), BF16),               # bf16 embeddings
        in_specs=[vmem() for _ in range(n_in)],
        out_specs=vmem(),
    )(pooled, adj, we, be, *flat_layers)


# --------------------------------------------------------------------------------------
# connectivity_head: Linear -> ReLU -> Linear -> ReLU -> Linear -> tanh, tiled over edges.
# Pair concat avoided by splitting W1 (pair@W = parent@Wa + child@Wb); the final (256,1)
# matmul is a VPU multiply + lane reduce; output is a lane-dense (te//128, 128) slab.
# --------------------------------------------------------------------------------------
def pair_mlp_kernel(parent_ref, child_ref, w1a, w1b, b1, w2, b2, w3, b3, out_ref):
    h = (jnp.dot(parent_ref[...], w1a[...], preferred_element_type=F32)   # inputs are bf16
         + jnp.dot(child_ref[...], w1b[...], preferred_element_type=F32)
         + b1[...])
    h = jnp.maximum(h, 0.0)
    h = jnp.dot(h.astype(BF16), w2[...], preferred_element_type=F32) + b2[...]
    h = jnp.maximum(h, 0.0)
    te = h.shape[0]
    h3 = h.reshape(te // 128, 128, h.shape[1])                            # layout-preserving
    score = jnp.sum(h3 * w3[...], axis=-1) + b3[...]                      # (te//128, 128)
    out_ref[...] = jnp.tanh(score)                                        # lane-dense store


def connectivity_head(parent, child, params, te=1024):
    E_pad, D = parent.shape                                               # multiple of te
    out = pl.pallas_call(
        pair_mlp_kernel,
        out_shape=jax.ShapeDtypeStruct((E_pad // 128, 128), F32),
        grid=(E_pad // te,),
        in_specs=[pl.BlockSpec((te, D), lambda i: (i, 0)),
                  pl.BlockSpec((te, D), lambda i: (i, 0))]
                 + [_full_spec(a) for a in params],
        out_specs=pl.BlockSpec((te // 128, 128), lambda i: (i, 0)),
        compiler_params=pltpu.CompilerParams(
            dimension_semantics=("parallel",),
            vmem_limit_bytes=32 * 1024 * 1024),
    )(parent, child, *params)
    return out.reshape(E_pad)                                             # (E_pad,)


# --------------------------------------------------------------------------------------
# Parameter construction (deterministic, PyTorch-default-style uniform init).
# --------------------------------------------------------------------------------------
def build_params(key, pt_out_dim=256, emb_dim=256, connect_dim=256,
                 gnn_channels=(256, 128, 128), gat_heads=(2, 2)):
    keys = list(jax.random.split(key, 64))
    it = iter(keys)

    def uni(shape, bound):
        return jax.random.uniform(next(it), shape, F32, minval=-bound, maxval=bound)

    def lin(fin, fout):
        bound = 1.0 / (fin ** 0.5)
        return uni((fin, fout), bound), uni((1, fout), bound)

    bn_s = 1.0 / jnp.sqrt(jnp.float32(1.0 + 1e-5))    # folded eval-mode BatchNorm1d

    w1, b1 = lin(6, 64)
    w2, b2 = lin(64, 128)
    w3, b3 = lin(128, pt_out_dim)
    pointnet = ((w1 * bn_s).astype(BF16), b1 * bn_s,
                (w2 * bn_s).astype(BF16), b2 * bn_s,
                (w3 * bn_s).astype(BF16), b3 * bn_s)

    we, be = lin(pt_out_dim, emb_dim)                 # object_embedding
    embed = (we.astype(BF16), be)

    gat = []
    for li in range(len(gnn_channels) - 1):
        fin = gnn_channels[li] * gat_heads[li - 1] if li else gnn_channels[li]
        fout, heads = gnn_channels[li + 1], gat_heads[li]
        w = uni((fin, heads * fout), 1.0 / (fin ** 0.5)).astype(BF16)
        a_src = uni((heads, fout), 1.0 / (fout ** 0.5))
        a_dst = uni((heads, fout), 1.0 / (fout ** 0.5))
        # block-diagonal a_src so all heads' source coefficients are one matmul
        a_src_blk = jnp.zeros((heads, heads * fout), F32)
        for hd in range(heads):
            a_src_blk = a_src_blk.at[hd, hd * fout:(hd + 1) * fout].set(a_src[hd])
        bias = jnp.zeros((1, heads * fout), F32)
        gat.append((w, a_src_blk, a_dst, bias))

    hw1, hb1 = lin(emb_dim * 2, connect_dim)
    hw2, hb2 = lin(connect_dim, connect_dim)
    hw3, hb3 = lin(connect_dim, 1)
    head = (hw1[:emb_dim].astype(BF16),               # W1a (parent half)
            hw1[emb_dim:].astype(BF16),               # W1b (child half)
            hb1,
            hw2.astype(BF16), hb2,
            hw3.reshape(1, connect_dim),              # final layer as a row (VPU reduce)
            hb3.reshape(1, 1))

    return {"pointnet": pointnet, "embed": embed, "gat": gat, "head": head}


# --------------------------------------------------------------------------------------
# Full forward pass (exact port of Connectivity3D.forward, gnn_type='gat').
# --------------------------------------------------------------------------------------
def connectivity3d_forward(data, params):
    pcls = data["pcls_arr"]                                   # (N_parts, P, 6)
    pooled = pointnet_pool(pcls, params["pointnet"])          # (N_parts, 256) f32
    N = pooled.shape[0]

    # ---- edge bookkeeping (host-side, vectorized; exact port incl. batch_start-only offset) ----
    batch_size = data["batch_size"]
    edge_blocks = []
    obj_order = []                                            # (bid, num_parts) traversal order
    for bid in range(batch_size):
        batch_start_idx = data["idxs_batch"][bid]
        parts_idxs_list = data["parts_idxs_list_batch"][bid]
        num_objs = len(parts_idxs_list) - 1
        for obj_idx in range(num_objs):
            num_parts = parts_idxs_list[obj_idx + 1] - parts_idxs_list[obj_idx]
            if num_parts > 1:
                ii, jj = np.meshgrid(np.arange(num_parts), np.arange(num_parts), indexing="ij")
                off = ii != jj                                # row-major (i, j), i != j
                src = (ii[off] + batch_start_idx).astype(np.int32)
                dst = (jj[off] + batch_start_idx).astype(np.int32)
                edge_blocks.append(np.stack([src, dst], axis=0))
            obj_order.append((bid, num_parts))
    edges_all = (np.concatenate(edge_blocks, axis=1) if edge_blocks
                 else np.zeros((2, 0), np.int32))             # (2, E)
    E = edges_all.shape[1]

    # dense multiplicity adjacency (bf16 on the wire: small integer counts are exact)
    adj_np = np.eye(N, dtype=np.float32)                      # self-loops
    if E:
        np.add.at(adj_np, (edges_all[1], edges_all[0]), 1.0)  # adj[dst, src] += 1
    adj = jnp.asarray(adj_np).astype(BF16)

    # ---- fused object_embedding + 2-layer GAT (bf16 part embeddings) ----
    part_embs = gnn_forward(pooled, adj, params["embed"], params["gat"])   # (N, 256) bf16

    # ---- pair gather (bf16, padded to the edge-tile size) + connectivity head ----
    if E:
        TE = 1024
        E_pad = _round_up(E, TE)
        edges_np = np.zeros((2, E_pad), dtype=np.int32)
        edges_np[:, :E] = edges_all
        edges = jnp.asarray(edges_np)
        parent = jnp.take(part_embs, edges[0], axis=0)        # (E_pad, 256) bf16
        child = jnp.take(part_embs, edges[1], axis=0)         # (E_pad, 256) bf16
        conn = connectivity_head(parent, child, params["head"], te=TE)[:E]
        conn_np = np.asarray(jax.device_get(conn))
    else:
        conn_np = np.zeros((0,), np.float32)

    # ---- per-object connectivity matrices: one device_get + numpy fill ----
    # Edge generation order is row-major over (i, j), i != j, per object, matching the
    # original edge_matrix_idx_map numbering exactly.
    connectivity_batch = [[] for _ in range(batch_size)]
    cursor = 0
    for bid, num_parts in obj_order:
        ne = num_parts * (num_parts - 1)
        mat = np.zeros((num_parts, num_parts), dtype=np.float32)
        if ne:
            off_diag = ~np.eye(num_parts, dtype=bool)
            mat[off_diag] = conn_np[cursor:cursor + ne]
            cursor += ne
        connectivity_batch[bid].append(jnp.asarray(mat))
    return connectivity_batch


# --------------------------------------------------------------------------------------
if __name__ == "__main__":
    key = jax.random.PRNGKey(0)
    k_data, k_param = jax.random.split(key)

    # small synthetic batch: batch 0 has one object (3 parts); batch 1 has two objects (2 + 3)
    batch_size = 2
    idxs_batch = [0, 3, 8]                        # global part offsets per batch element
    parts_idxs_list_batch = [[0, 3], [0, 2, 5]]
    num_parts_total = idxs_batch[-1]              # 8 parts
    num_points = 64
    pcls_arr = jax.random.normal(k_data, (num_parts_total, num_points, 6), F32)

    data = {
        "pcls_arr": pcls_arr,
        "batch_size": batch_size,
        "idxs_batch": idxs_batch,
        "parts_idxs_list_batch": parts_idxs_list_batch,
    }

    params = build_params(k_param, pt_out_dim=256, emb_dim=256, connect_dim=256,
                          gnn_channels=(256, 128, 128), gat_heads=(2, 2))

    out = connectivity3d_forward(data, params)
    jax.block_until_ready(out)
    print("KERNEL_OK")
</pallas_src>

<mosaic_0001>
module attributes {stable_mosaic.version = 11 : i64} {
  func.func @pointnet_pool_kernel(%arg0: i32, %arg1: memref<512x6xbf16, #tpu.memory_space<vmem>>, %arg2: memref<6x64xbf16, #tpu.memory_space<vmem>>, %arg3: memref<1x64xf32, #tpu.memory_space<vmem>>, %arg4: memref<64x128xbf16, #tpu.memory_space<vmem>>, %arg5: memref<1x128xf32, #tpu.memory_space<vmem>>, %arg6: memref<128x256xbf16, #tpu.memory_space<vmem>>, %arg7: memref<1x256xf32, #tpu.memory_space<vmem>>, %arg8: memref<8x256xf32, #tpu.memory_space<vmem>>) attributes {dimension_semantics = [#tpu.dimension_semantics<parallel>], iteration_bounds = array<i64: 1>, scalar_prefetch = 0 : i64, scratch_operands = 0 : i64, tpu.core_type = #tpu.core_type<tc>, window_params = [{transform_indices = @transform_0, window_bounds = array<i64: 512, 6>}, {pipeline_mode = #tpu.pipeline_mode<synchronous>, transform_indices = @transform_1, window_bounds = array<i64: 6, 64>}, {pipeline_mode = #tpu.pipeline_mode<synchronous>, transform_indices = @transform_2, window_bounds = array<i64: 1, 64>}, {pipeline_mode = #tpu.pipeline_mode<synchronous>, transform_indices = @transform_3, window_bounds = array<i64: 64, 128>}, {pipeline_mode = #tpu.pipeline_mode<synchronous>, transform_indices = @transform_4, window_bounds = array<i64: 1, 128>}, {pipeline_mode = #tpu.pipeline_mode<synchronous>, transform_indices = @transform_5, window_bounds = array<i64: 128, 256>}, {pipeline_mode = #tpu.pipeline_mode<synchronous>, transform_indices = @transform_6, window_bounds = array<i64: 1, 256>}, {transform_indices = @transform_7, window_bounds = array<i64: 8, 256>}]} {
    %c0 = arith.constant 0 : index
    %c0_0 = arith.constant 0 : index
    %0 = vector.load %arg1[%c0, %c0_0] : memref<512x6xbf16, #tpu.memory_space<vmem>>, vector<512x6xbf16>
    %c0_1 = arith.constant 0 : index
    %c0_2 = arith.constant 0 : index
    %1 = vector.load %arg2[%c0_1, %c0_2] : memref<6x64xbf16, #tpu.memory_space<vmem>>, vector<6x64xbf16>
    %cst = arith.constant dense<0.000000e+00> : vector<512x64xf32>
    %2 = tpu.matmul %0, %1, %cst {dimension_numbers = #tpu.dot_dimension_numbers<[1], [0], [0], [1], [0, 0, 1, 1], [], []>} : vector<512x6xbf16>, vector<6x64xbf16>, vector<512x64xf32> -> vector<512x64xf32>
    %c0_3 = arith.constant 0 : index
    %c0_4 = arith.constant 0 : index
    %3 = vector.load %arg3[%c0_3, %c0_4] : memref<1x64xf32, #tpu.memory_space<vmem>>, vector<1x64xf32>
    %4 = vector.broadcast %3 : vector<1x64xf32> to vector<512x64xf32>
    %5 = arith.addf %2, %4 : vector<512x64xf32>
    %cst_5 = arith.constant 0.000000e+00 : f32
    %6 = vector.broadcast %cst_5 : f32 to vector<512x64xf32>
    %7 = arith.maximumf %5, %6 : vector<512x64xf32>
    %8 = arith.truncf %7 : vector<512x64xf32> to vector<512x64xbf16>
    %c0_6 = arith.constant 0 : index
    %c0_7 = arith.constant 0 : index
    %9 = vector.load %arg4[%c0_6, %c0_7] : memref<64x128xbf16, #tpu.memory_space<vmem>>, vector<64x128xbf16>
    %cst_8 = arith.constant dense<0.000000e+00> : vector<512x128xf32>
    %10 = tpu.matmul %8, %9, %cst_8 {dimension_numbers = #tpu.dot_dimension_numbers<[1], [0], [0], [1], [0, 0, 1, 1], [], []>} : vector<512x64xbf16>, vector<64x128xbf16>, vector<512x128xf32> -> vector<512x128xf32>
    %c0_9 = arith.constant 0 : index
    %c0_10 = arith.constant 0 : index
    %11 = vector.load %arg5[%c0_9, %c0_10] : memref<1x128xf32, #tpu.memory_space<vmem>>, vector<1x128xf32>
    %12 = vector.broadcast %11 : vector<1x128xf32> to vector<512x128xf32>
    %13 = arith.addf %10, %12 : vector<512x128xf32>
    %cst_11 = arith.constant 0.000000e+00 : f32
    %14 = vector.broadcast %cst_11 : f32 to vector<512x128xf32>
    %15 = arith.maximumf %13, %14 : vector<512x128xf32>
    %16 = arith.truncf %15 : vector<512x128xf32> to vector<512x128xbf16>
    %c0_12 = arith.constant 0 : index
    %c0_13 = arith.constant 0 : index
    %17 = vector.load %arg6[%c0_12, %c0_13] : memref<128x256xbf16, #tpu.memory_space<vmem>>, vector<128x256xbf16>
    %cst_14 = arith.constant dense<0.000000e+00> : vector<512x256xf32>
    %18 = tpu.matmul %16, %17, %cst_14 {dimension_numbers = #tpu.dot_dimension_numbers<[1], [0], [0], [1], [0, 0, 1, 1], [], []>} : vector<512x128xbf16>, vector<128x256xbf16>, vector<512x256xf32> -> vector<512x256xf32>
    %c0_15 = arith.constant 0 : index
    %c0_16 = arith.constant 0 : index
    %19 = vector.load %arg7[%c0_15, %c0_16] : memref<1x256xf32, #tpu.memory_space<vmem>>, vector<1x256xf32>
    %20 = vector.broadcast %19 : vector<1x256xf32> to vector<512x256xf32>
    %21 = arith.addf %18, %20 : vector<512x256xf32>
    %22 = vector.shape_cast %21 : vector<512x256xf32> to vector<8x64x256xf32>
    %cst_17 = arith.constant dense<0xFF800000> : vector<8x256xf32>
    %23 = vector.multi_reduction <maximumf>, %22, %cst_17 [1] : vector<8x64x256xf32> to vector<8x256xf32>
    %c0_18 = arith.constant 0 : index
    %c0_19 = arith.constant 0 : index
    %24 = vector.load %arg8[%c0_18, %c0_19] : memref<8x256xf32, #tpu.memory_space<vmem>>, vector<8x256xf32>
    tpu.vector_store %arg8[%c0_18, %c0_19], %23 {strides = array<i32>} : memref<8x256xf32, #tpu.memory_space<vmem>>, vector<8x256xf32>,
    return
  }
  func.func @transform_0(%arg0: i32) -> (i32, i32) {
    %c0_i32 = arith.constant 0 : i32
    %c0_i32_0 = arith.constant 0 : i32
    return %arg0, %c0_i32 : i32, i32
  }
  func.func @transform_1(%arg0: i32) -> (i32, i32) {
    %c0_i32 = arith.constant 0 : i32
    %c0_i32_0 = arith.constant 0 : i32
    %c0_i32_1 = arith.constant 0 : i32
    return %c0_i32, %c0_i32_0 : i32, i32
  }
  func.func @transform_2(%arg0: i32) -> (i32, i32) {
    %c0_i32 = arith.constant 0 : i32
    %c0_i32_0 = arith.constant 0 : i32
    %c0_i32_1 = arith.constant 0 : i32
    return %c0_i32, %c0_i32_0 : i32, i32
  }
  func.func @transform_3(%arg0: i32) -> (i32, i32) {
    %c0_i32 = arith.constant 0 : i32
    %c0_i32_0 = arith.constant 0 : i32
    %c0_i32_1 = arith.constant 0 : i32
    return %c0_i32, %c0_i32_0 : i32, i32
  }
  func.func @transform_4(%arg0: i32) -> (i32, i32) {
    %c0_i32 = arith.constant 0 : i32
    %c0_i32_0 = arith.constant 0 : i32
    %c0_i32_1 = arith.constant 0 : i32
    return %c0_i32, %c0_i32_0 : i32, i32
  }
  func.func @transform_5(%arg0: i32) -> (i32, i32) {
    %c0_i32 = arith.constant 0 : i32
    %c0_i32_0 = arith.constant 0 : i32
    %c0_i32_1 = arith.constant 0 : i32
    return %c0_i32, %c0_i32_0 : i32, i32
  }
  func.func @transform_6(%arg0: i32) -> (i32, i32) {
    %c0_i32 = arith.constant 0 : i32
    %c0_i32_0 = arith.constant 0 : i32
    %c0_i32_1 = arith.constant 0 : i32
    return %c0_i32, %c0_i32_0 : i32, i32
  }
  func.func @transform_7(%arg0: i32) -> (i32, i32) {
    %c0_i32 = arith.constant 0 : i32
    %c0_i32_0 = arith.constant 0 : i32
    return %arg0, %c0_i32 : i32, i32
  }
}

</mosaic_0001>

<llo_original>
// kernel: tpu_custom_call.1
$region0: #{tpu_custom_call.1}
  #allocation0 [shape = 'u32[]', space=smem, size = 0x4, offset = 0x4, fixed_abs, tag = 'smem constant byte address 0x4 - core index']
  #allocation1 [shape = 'u32[144,128]{1,0:T(1,128)}', space=vmem, size = 0x12000, scoped, tag = 'internal scratch']
  %s0 = inlined_call_operand.vmem [shape: bf16[512,6], index: 0, kind: input, shape index: {}]
  %s1 = inlined_call_operand.vmem [shape: bf16[6,64], index: 1, kind: input, shape index: {}]
  %s2 = inlined_call_operand.vmem [shape: f32[1,64], index: 2, kind: input, shape index: {}]
  %s3 = inlined_call_operand.vmem [shape: bf16[64,128], index: 3, kind: input, shape index: {}]
  %s4 = inlined_call_operand.vmem [shape: f32[1,128], index: 4, kind: input, shape index: {}]
  %s5 = inlined_call_operand.vmem [shape: bf16[128,256], index: 5, kind: input, shape index: {}]
  %s6 = inlined_call_operand.vmem [shape: f32[1,256], index: 6, kind: input, shape index: {}]
  %s7 = inlined_call_operand.hbm [shape: f32[8,256], index: 7, kind: output, shape index: {}]
  %s8 = sld [smem:[#allocation0]]
  $region38: #{tpu_custom_call.1} parent=0
    _
  %s10 = ssub.s32 1, %s8
  %s11 = scalar_select 0, %s10, %s8
  $region1: #{tpu_custom_call.1} parent=0
    #allocation2 [shape = 'u8[8192]{0}', space=vmem, size = 0x2000, scoped, tag = 'output window, operand 0, single buffered']
    #allocation3 [shape = 's32[1]{0}', space=sflag, size = 0x4, scoped, tag = 'scoped memory for tpu_custom_call.1']
    %12 = vsyncpa [#allocation3], 0
    // Predicated region
    $region2: #{tpu_custom_call.1} parent=1 // pred_check
      _
    $region3: #{tpu_custom_call.1} parent=1 // pred_check_branch
      %14 = sbr.rel (0) target = $region5
    $region4: #{tpu_custom_call.1} parent=1 // pred_region
      _
    $region5: #{tpu_custom_call.1} parent=1 // pred_fallthru
      _
    // Predicated region
    $region6: #{tpu_custom_call.1} parent=1 // pred_check
      _
    $region7: #{tpu_custom_call.1} parent=1 // pred_check_branch
      %16 = sbr.rel (0) target = $region9
    $region8: #{tpu_custom_call.1} parent=1 // pred_region
      _
    $region9: #{tpu_custom_call.1} parent=1 // pred_fallthru
      _
    // Predicated region
    $region10: #{tpu_custom_call.1} parent=1 // pred_check
      _
    $region11: #{tpu_custom_call.1} parent=1 // pred_check_branch
      %18 = sbr.rel (0) target = $region13
    $region12: #{tpu_custom_call.1} parent=1 // pred_region
      _
    $region13: #{tpu_custom_call.1} parent=1 // pred_fallthru
      _
    // Predicated region
    $region14: #{tpu_custom_call.1} parent=1 // pred_check
      _
    $region15: #{tpu_custom_call.1} parent=1 // pred_check_branch
      %20 = sbr.rel (0) target = $region17
    $region16: #{tpu_custom_call.1} parent=1 // pred_region
      _
    $region17: #{tpu_custom_call.1} parent=1 // pred_fallthru
      _
    // Predicated region
    $region18: #{tpu_custom_call.1} parent=1 // pred_check
      _
    $region19: #{tpu_custom_call.1} parent=1 // pred_check_branch
      %22 = sbr.rel (0) target = $region21
    $region20: #{tpu_custom_call.1} parent=1 // pred_region
      _
    $region21: #{tpu_custom_call.1} parent=1 // pred_fallthru
      _
    // Predicated region
    $region22: #{tpu_custom_call.1} parent=1 // pred_check
      _
    $region23: #{tpu_custom_call.1} parent=1 // pred_check_branch
      %24 = sbr.rel (0) target = $region25
    $region24: #{tpu_custom_call.1} parent=1 // pred_region
      _
    $region25: #{tpu_custom_call.1} parent=1 // pred_fallthru
      _
    // Predicated region
    $region26: #{tpu_custom_call.1} parent=1 // pred_check
      _
    $region27: #{tpu_custom_call.1} parent=1 // pred_check_branch
      %26 = sbr.rel (0) target = $region29
    $region28: #{tpu_custom_call.1} parent=1 // pred_region
      _
    $region29: #{tpu_custom_call.1} parent=1 // pred_fallthru
      _
    %v28 = vld [vmem:[%s0] sm:$0xf]
    %v29 = vld [vmem:[%s0 + $0x4] sm:$0xf]
    %v30 = vld [vmem:[%s0 + $0x8] sm:$0xf]
    %v31 = vld [vmem:[%s0 + $0xc] sm:$0xf]
    %v32 = vld [vmem:[%s0 + $0x10] sm:$0xf]
    %v33 = vld [vmem:[%s0 + $0x14] sm:$0xf]
    %v34 = vld [vmem:[%s0 + $0x18] sm:$0xf]
    %v35 = vld [vmem:[%s0 + $0x1c] sm:$0xf]
    %v36 = vld [vmem:[%s0 + $0x20] sm:$0xf]
    %v37 = vld [vmem:[%s0 + $0x24] sm:$0xf]
    %v38 = vld [vmem:[%s0 + $0x28] sm:$0xf]
    %v39 = vld [vmem:[%s0 + $0x2c] sm:$0xf]
    %v40 = vld [vmem:[%s0 + $0x30] sm:$0xf]
    %v41 = vld [vmem:[%s0 + $0x34] sm:$0xf]
    %v42 = vld [vmem:[%s0 + $0x38] sm:$0xf]
    %v43 = vld [vmem:[%s0 + $0x3c] sm:$0xf]
    %v44 = vld [vmem:[%s0 + $0x40] sm:$0xf]
    %v45 = vld [vmem:[%s0 + $0x44] sm:$0xf]
    %v46 = vld [vmem:[%s0 + $0x48] sm:$0xf]
    %v47 = vld [vmem:[%s0 + $0x4c] sm:$0xf]
    %v48 = vld [vmem:[%s0 + $0x50] sm:$0xf]
    %v49 = vld [vmem:[%s0 + $0x54] sm:$0xf]
    %v50 = vld [vmem:[%s0 + $0x58] sm:$0xf]
    %v51 = vld [vmem:[%s0 + $0x5c] sm:$0xf]
    %v52 = vld [vmem:[%s0 + $0x60] sm:$0xf]
    %v53 = vld [vmem:[%s0 + $0x64] sm:$0xf]
    %v54 = vld [vmem:[%s0 + $0x68] sm:$0xf]
    %v55 = vld [vmem:[%s0 + $0x6c] sm:$0xf]
    %v56 = vld [vmem:[%s0 + $0x70] sm:$0xf]
    %v57 = vld [vmem:[%s0 + $0x74] sm:$0xf]
    %v58 = vld [vmem:[%s0 + $0x78] sm:$0xf]
    %v59 = vld [vmem:[%s0 + $0x7c] sm:$0xf]
    %v60 = vld [vmem:[%s0 + $0x80] sm:$0xf]
    %v61 = vld [vmem:[%s0 + $0x84] sm:$0xf]
    %v62 = vld [vmem:[%s0 + $0x88] sm:$0xf]
    %v63 = vld [vmem:[%s0 + $0x8c] sm:$0xf]
    %v64 = vld [vmem:[%s0 + $0x90] sm:$0xf]
    %v65 = vld [vmem:[%s0 + $0x94] sm:$0xf]
    %v66 = vld [vmem:[%s0 + $0x98] sm:$0xf]
    %v67 = vld [vmem:[%s0 + $0x9c] sm:$0xf]
    %v68 = vld [vmem:[%s0 + $0xa0] sm:$0xf]
    %v69 = vld [vmem:[%s0 + $0xa4] sm:$0xf]
    %v70 = vld [vmem:[%s0 + $0xa8] sm:$0xf]
    %v71 = vld [vmem:[%s0 + $0xac] sm:$0xf]
    %v72 = vld [vmem:[%s0 + $0xb0] sm:$0xf]
    %v73 = vld [vmem:[%s0 + $0xb4] sm:$0xf]
    %v74 = vld [vmem:[%s0 + $0xb8] sm:$0xf]
    %v75 = vld [vmem:[%s0 + $0xbc] sm:$0xf]
    %v76 = vld [vmem:[%s0 + $0xc0] sm:$0xf]
    %v77 = vld [vmem:[%s0 + $0xc4] sm:$0xf]
    %v78 = vld [vmem:[%s0 + $0xc8] sm:$0xf]
    %v79 = vld [vmem:[%s0 + $0xcc] sm:$0xf]
    %v80 = vld [vmem:[%s0 + $0xd0] sm:$0xf]
    %v81 = vld [vmem:[%s0 + $0xd4] sm:$0xf]
    %v82 = vld [vmem:[%s0 + $0xd8] sm:$0xf]
    %v83 = vld [vmem:[%s0 + $0xdc] sm:$0xf]
    %v84 = vld [vmem:[%s0 + $0xe0] sm:$0xf]
    %v85 = vld [vmem:[%s0 + $0xe4] sm:$0xf]
    %v86 = vld [vmem:[%s0 + $0xe8] sm:$0xf]
    %v87 = vld [vmem:[%s0 + $0xec] sm:$0xf]
    %v88 = vld [vmem:[%s0 + $0xf0] sm:$0xf]
    %v89 = vld [vmem:[%s0 + $0xf4] sm:$0xf]
    %v90 = vld [vmem:[%s0 + $0xf8] sm:$0xf]
    %v91 = vld [vmem:[%s0 + $0xfc] sm:$0xf]
    %v92 = vld [vmem:[%s1] sm:$0x7]
    %v93 = vld [vmem:[%s2] sm:$0x1]
    %v95 = vlaneseq
    %v96 = vshrl.u32 %v95, 7
    %v97 = vsub.s32 0, %v96
    %v98 = vrot.slane %v93, %v97
    %v164 = vunpack.c.l.b16 %v28
    %v165 = vunpack.c.l.b16 %v29
    %v166 = vunpack.c.l.b16 %v30
    %v167 = vunpack.c.l.b16 %v31
    %v168 = vunpack.c.l.b16 %v32
    %v169 = vunpack.c.l.b16 %v33
    %v170 = vunpack.c.l.b16 %v34
    %v171 = vunpack.c.l.b16 %v35
    %v172 = vunpack.c.l.b16 %v36
    %v173 = vunpack.c.l.b16 %v37
    %v174 = vunpack.c.l.b16 %v38
    %v175 = vunpack.c.l.b16 %v39
    %v176 = vunpack.c.l.b16 %v40
    %v177 = vunpack.c.l.b16 %v41
    %v178 = vunpack.c.l.b16 %v42
    %v179 = vunpack.c.l.b16 %v43
    %v180 = vunpack.c.l.b16 %v44
    %v181 = vunpack.c.l.b16 %v45
    %v182 = vunpack.c.l.b16 %v46
    %v183 = vunpack.c.l.b16 %v47
    %v184 = vunpack.c.l.b16 %v48
    %v185 = vunpack.c.l.b16 %v49
    %v186 = vunpack.c.l.b16 %v50
    %v187 = vunpack.c.l.b16 %v51
    %v188 = vunpack.c.l.b16 %v52
    %v189 = vunpack.c.l.b16 %v53
    %v190 = vunpack.c.l.b16 %v54
    %v191 = vunpack.c.l.b16 %v55
    %v192 = vunpack.c.l.b16 %v56
    %v193 = vunpack.c.l.b16 %v57
    %v194 = vunpack.c.l.b16 %v58
    %v195 = vunpack.c.l.b16 %v59
    %v196 = vunpack.c.l.b16 %v60
    %v197 = vunpack.c.l.b16 %v61
    %v198 = vunpack.c.l.b16 %v62
    %v199 = vunpack.c.l.b16 %v63
    %v200 = vunpack.c.l.b16 %v64
    %v201 = vunpack.c.l.b16 %v65
    %v202 = vunpack.c.l.b16 %v66
    %v203 = vunpack.c.l.b16 %v67
    %v204 = vunpack.c.l.b16 %v68
    %v205 = vunpack.c.l.b16 %v69
    %v206 = vunpack.c.l.b16 %v70
    %v207 = vunpack.c.l.b16 %v71
    %v208 = vunpack.c.l.b16 %v72
    %v209 = vunpack.c.l.b16 %v73
    %v210 = vunpack.c.l.b16 %v74
    %v211 = vunpack.c.l.b16 %v75
    %v212 = vunpack.c.l.b16 %v76
    %v213 = vunpack.c.l.b16 %v77
    %v214 = vunpack.c.l.b16 %v78
    %v215 = vunpack.c.l.b16 %v79
    %v216 = vunpack.c.l.b16 %v80
    %v217 = vunpack.c.l.b16 %v81
    %v218 = vunpack.c.l.b16 %v82
    %v219 = vunpack.c.l.b16 %v83
    %v220 = vunpack.c.l.b16 %v84
    %v221 = vunpack.c.l.b16 %v85
    %v222 = vunpack.c.l.b16 %v86
    %v223 = vunpack.c.l.b16 %v87
    %v224 = vunpack.c.l.b16 %v88
    %v225 = vunpack.c.l.b16 %v89
    %v226 = vunpack.c.l.b16 %v90
    %v227 = vunpack.c.l.b16 %v91
    %v228 = vpack.c.b16 %v165, %v164
    %v229 = vpack.c.b16 %v167, %v166
    %v230 = vpack.c.b16 %v169, %v168
    %v231 = vpack.c.b16 %v171, %v170
    %v232 = vpack.c.b16 %v173, %v172
    %v233 = vpack.c.b16 %v175, %v174
    %v234 = vpack.c.b16 %v177, %v176
    %v235 = vpack.c.b16 %v179, %v178
    %v236 = vpack.c.b16 %v181, %v180
    %v237 = vpack.c.b16 %v183, %v182
    %v238 = vpack.c.b16 %v185, %v184
    %v239 = vpack.c.b16 %v187, %v186
    %v240 = vpack.c.b16 %v189, %v188
    %v241 = vpack.c.b16 %v191, %v190
    %v242 = vpack.c.b16 %v193, %v192
    %v243 = vpack.c.b16 %v195, %v194
    %v244 = vpack.c.b16 %v197, %v196
    %v245 = vpack.c.b16 %v199, %v198
    %v246 = vpack.c.b16 %v201, %v200
    %v247 = vpack.c.b16 %v203, %v202
    %v248 = vpack.c.b16 %v205, %v204
    %v249 = vpack.c.b16 %v207, %v206
    %v250 = vpack.c.b16 %v209, %v208
    %v251 = vpack.c.b16 %v211, %v210
    %v252 = vpack.c.b16 %v213, %v212
    %v253 = vpack.c.b16 %v215, %v214
    %v254 = vpack.c.b16 %v217, %v216
    %v255 = vpack.c.b16 %v219, %v218
    %v256 = vpack.c.b16 %v221, %v220
    %v257 = vpack.c.b16 %v223, %v222
    %v258 = vpack.c.b16 %v225, %v224
    %v259 = vpack.c.b16 %v227, %v226
    %vm260 = vcmask 48128
    %v262 = vsel %vm260, %v228, 0
    %v265 = vsel %vm260, %v229, 0
    %v268 = vsel %vm260, %v230, 0
    %v271 = vsel %vm260, %v231, 0
    %v274 = vsel %vm260, %v232, 0
    %v277 = vsel %vm260, %v233, 0
    %v280 = vsel %vm260, %v234, 0
    %v283 = vsel %vm260, %v235, 0
    %v286 = vsel %vm260, %v236, 0
    %v289 = vsel %vm260, %v237, 0
    %v292 = vsel %vm260, %v238, 0
    %v295 = vsel %vm260, %v239, 0
    %v298 = vsel %vm260, %v240, 0
    %v301 = vsel %vm260, %v241, 0
    %v304 = vsel %vm260, %v242, 0
    %v307 = vsel %vm260, %v243, 0
    %v310 = vsel %vm260, %v244, 0
    %v313 = vsel %vm260, %v245, 0
    %v316 = vsel %vm260, %v246, 0
    %v319 = vsel %vm260, %v247, 0
    %v322 = vsel %vm260, %v248, 0
    %v325 = vsel %vm260, %v249, 0
    %v328 = vsel %vm260, %v250, 0
    %v331 = vsel %vm260, %v251, 0
    %v334 = vsel %vm260, %v252, 0
    %v337 = vsel %vm260, %v253, 0
    %v340 = vsel %vm260, %v254, 0
    %v343 = vsel %vm260, %v255, 0
    %v346 = vsel %vm260, %v256, 0
    %v349 = vsel %vm260, %v257, 0
    %v352 = vsel %vm260, %v258, 0
    %v355 = vsel %vm260, %v259, 0
    %vm357 = vcmask 1042432
    %v359 = vsel %vm357, %v92, 0
    %361 = vmatprep.subr.bf16.mxu0 0
    %362 = vmatpush1.bf16.msra.mxu0 0
    %363 = vmatprep.subr.bf16.mxu0 0
    %364 = vmatpush1.bf16.msra.mxu0 0
    %365 = vmatprep.subr.bf16.mxu0 0
    %366 = vmatpush1.bf16.msra.mxu0 0
    %367 = vmatprep.subr.bf16.mxu0 0
    %368 = vmatpush1.bf16.msra.mxu0 0
    %369 = vmatprep.subr.bf16.mxu0 0
    %370 = vmatpush1.bf16.msra.mxu0 0
    %371 = vmatprep.subr.bf16.mxu0 0
    %372 = vmatpush1.bf16.msra.mxu0 0
    %373 = vmatprep.subr.bf16.mxu0 0
    %374 = vmatpush1.bf16.msra.mxu0 0
    %375 = vmatprep.subr.bf16.mxu0 0
    %376 = vmatpush1.bf16.msra.mxu0 %v359
    %377 = vmatprep.subr.bf16.mxu0 0
    %378 = vmatpush2.bf16.msra.mxu0 0
    %379 = vmatprep.subr.bf16.mxu0 0
    %380 = vmatpush2.bf16.msra.mxu0 0
    %381 = vmatprep.subr.bf16.mxu0 0
    %382 = vmatpush2.bf16.msra.mxu0 0
    %383 = vmatprep.subr.bf16.mxu0 0
    %384 = vmatpush2.bf16.msra.mxu0 0
    %385 = vmatprep.subr.bf16.mxu0 0
    %386 = vmatpush2.bf16.msra.mxu0 0
    %387 = vmatprep.subr.bf16.mxu0 0
    %388 = vmatpush2.bf16.msra.mxu0 0
    %389 = vmatprep.subr.bf16.mxu0 0
    %390 = vmatpush2.bf16.msra.mxu0 0
    %391 = vmatprep.subr.bf16.mxu0 0
    %392 = vmatpush2.bf16.msra.mxu0 0
    %393 = vmatprep.mubr.bf16.mxu0 0
    %394 = vmatmul.mubr.bf16.gmra.mxu0 %v262
    %v395 = vpop.f32.mrf.mxu0
    %v396 = vadd.f32 %v98, %v395
    %v397 = vpop.f32.mrf.mxu0
    %v398 = vpop.f32.mrf.mxu0
    %v399 = vadd.f32 %v98, %v398
    %v400 = vpop.f32.mrf.mxu0
    %401 = vmatprep.mubr.bf16.mxu0 0
    %402 = vmatmul.mubr.bf16.gmra.mxu0 %v265
    %v403 = vpop.f32.mrf.mxu0
    %v404 = vadd.f32 %v98, %v403
    %v405 = vpop.f32.mrf.mxu0
    %v406 = vpop.f32.mrf.mxu0
    %v407 = vadd.f32 %v98, %v406
    %v408 = vpop.f32.mrf.mxu0
    %409 = vmatprep.mubr.bf16.mxu0 0
    %410 = vmatmul.mubr.bf16.gmra.mxu0 %v268
    %v411 = vpop.f32.mrf.mxu0
    %v412 = vadd.f32 %v98, %v411
    %v413 = vpop.f32.mrf.mxu0
    %v414 = vpop.f32.mrf.mxu0
    %v415 = vadd.f32 %v98, %v414
    %v416 = vpop.f32.mrf.mxu0
    %417 = vmatprep.mubr.bf16.mxu0 0
    %418 = vmatmul.mubr.bf16.gmra.mxu0 %v271
    %v419 = vpop.f32.mrf.mxu0
    %v420 = vadd.f32 %v98, %v419
    %v421 = vpop.f32.mrf.mxu0
    %v422 = vpop.f32.mrf.mxu0
    %v423 = vadd.f32 %v98, %v422
    %v424 = vpop.f32.mrf.mxu0
    %425 = vmatprep.mubr.bf16.mxu0 0
    %426 = vmatmul.mubr.bf16.gmra.mxu0 %v274
    %v427 = vpop.f32.mrf.mxu0
    %v428 = vadd.f32 %v98, %v427
    %v429 = vpop.f32.mrf.mxu0
    %v430 = vpop.f32.mrf.mxu0
    %v431 = vadd.f32 %v98, %v430
    %v432 = vpop.f32.mrf.mxu0
    %433 = vmatprep.mubr.bf16.mxu0 0
    %434 = vmatmul.mubr.bf16.gmra.mxu0 %v277
    %v435 = vpop.f32.mrf.mxu0
    %v436 = vadd.f32 %v98, %v435
    %v437 = vpop.f32.mrf.mxu0
    %v438 = vpop.f32.mrf.mxu0
    %v439 = vadd.f32 %v98, %v438
    %v440 = vpop.f32.mrf.mxu0
    %441 = vmatprep.mubr.bf16.mxu0 0
    %442 = vmatmul.mubr.bf16.gmra.mxu0 %v280
    %v443 = vpop.f32.mrf.mxu0
    %v444 = vadd.f32 %v98, %v443
    %v445 = vpop.f32.mrf.mxu0
    %v446 = vpop.f32.mrf.mxu0
    %v447 = vadd.f32 %v98, %v446
    %v448 = vpop.f32.mrf.mxu0
    %449 = vmatprep.mubr.bf16.mxu0 0
    %450 = vmatmul.mubr.bf16.gmra.mxu0 %v283
    %v451 = vpop.f32.mrf.mxu0
    %v452 = vadd.f32 %v98, %v451
    %v453 = vpop.f32.mrf.mxu0
    %v454 = vpop.f32.mrf.mxu0
    %v455 = vadd.f32 %v98, %v454
    %v456 = vpop.f32.mrf.mxu0
    %457 = vmatprep.mubr.bf16.mxu0 0
    %458 = vmatmul.mubr.bf16.gmra.mxu0 %v286
    %v459 = vpop.f32.mrf.mxu0
    %v460 = vadd.f32 %v98, %v459
    %v461 = vpop.f32.mrf.mxu0
    %v462 = vpop.f32.mrf.mxu0
    %v463 = vadd.f32 %v98, %v462
    %v464 = vpop.f32.mrf.mxu0
    %465 = vmatprep.mubr.bf16.mxu0 0
    %466 = vmatmul.mubr.bf16.gmra.mxu0 %v289
    %v467 = vpop.f32.mrf.mxu0
    %v468 = vadd.f32 %v98, %v467
    %v469 = vpop.f32.mrf.mxu0
    %v470 = vpop.f32.mrf.mxu0
    %v471 = vadd.f32 %v98, %v470
    %v472 = vpop.f32.mrf.mxu0
    %473 = vmatprep.mubr.bf16.mxu0 0
    %474 = vmatmul.mubr.bf16.gmra.mxu0 %v292
    %v475 = vpop.f32.mrf.mxu0
    %v476 = vadd.f32 %v98, %v475
    %v477 = vpop.f32.mrf.mxu0
    %v478 = vpop.f32.mrf.mxu0
    %v479 = vadd.f32 %v98, %v478
    %v480 = vpop.f32.mrf.mxu0
    %481 = vmatprep.mubr.bf16.mxu0 0
    %482 = vmatmul.mubr.bf16.gmra.mxu0 %v295
    %v483 = vpop.f32.mrf.mxu0
    %v484 = vadd.f32 %v98, %v483
    %v485 = vpop.f32.mrf.mxu0
    %v486 = vpop.f32.mrf.mxu0
    %v487 = vadd.f32 %v98, %v486
    %v488 = vpop.f32.mrf.mxu0
    %489 = vmatprep.mubr.bf16.mxu0 0
    %490 = vmatmul.mubr.bf16.gmra.mxu0 %v298
    %v491 = vpop.f32.mrf.mxu0
    %v492 = vadd.f32 %v98, %v491
    %v493 = vpop.f32.mrf.mxu0
    %v494 = vpop.f32.mrf.mxu0
    %v495 = vadd.f32 %v98, %v494
    %v496 = vpop.f32.mrf.mxu0
    %497 = vmatprep.mubr.bf16.mxu0 0
    %498 = vmatmul.mubr.bf16.gmra.mxu0 %v301
    %v499 = vpop.f32.mrf.mxu0
    %v500 = vadd.f32 %v98, %v499
    %v501 = vpop.f32.mrf.mxu0
    %v502 = vpop.f32.mrf.mxu0
    %v503 = vadd.f32 %v98, %v502
    %v504 = vpop.f32.mrf.mxu0
    %505 = vmatprep.mubr.bf16.mxu0 0
    %506 = vmatmul.mubr.bf16.gmra.mxu0 %v304
    %v507 = vpop.f32.mrf.mxu0
    %v508 = vadd.f32 %v98, %v507
    %v509 = vpop.f32.mrf.mxu0
    %v510 = vpop.f32.mrf.mxu0
    %v511 = vadd.f32 %v98, %v510
    %v512 = vpop.f32.mrf.mxu0
    %513 = vmatprep.mubr.bf16.mxu0 0
    %514 = vmatmul.mubr.bf16.gmra.mxu0 %v307
    %v515 = vpop.f32.mrf.mxu0
    %v516 = vadd.f32 %v98, %v515
    %v517 = vpop.f32.mrf.mxu0
    %v518 = vpop.f32.mrf.mxu0
    %v519 = vadd.f32 %v98, %v518
    %v520 = vpop.f32.mrf.mxu0
    %521 = vmatprep.mubr.bf16.mxu0 0
    %522 = vmatmul.mubr.bf16.gmra.mxu0 %v310
    %v523 = vpop.f32.mrf.mxu0
    %v524 = vadd.f32 %v98, %v523
    %v525 = vpop.f32.mrf.mxu0
    %v526 = vpop.f32.mrf.mxu0
    %v527 = vadd.f32 %v98, %v526
    %v528 = vpop.f32.mrf.mxu0
    %529 = vmatprep.mubr.bf16.mxu0 0
    %530 = vmatmul.mubr.bf16.gmra.mxu0 %v313
    %v531 = vpop.f32.mrf.mxu0
    %v532 = vadd.f32 %v98, %v531
    %v533 = vpop.f32.mrf.mxu0
    %v534 = vpop.f32.mrf.mxu0
    %v535 = vadd.f32 %v98, %v534
    %v536 = vpop.f32.mrf.mxu0
    %537 = vmatprep.mubr.bf16.mxu0 0
    %538 = vmatmul.mubr.bf16.gmra.mxu0 %v316
    %v539 = vpop.f32.mrf.mxu0
    %v540 = vadd.f32 %v98, %v539
    %v541 = vpop.f32.mrf.mxu0
    %v542 = vpop.f32.mrf.mxu0
    %v543 = vadd.f32 %v98, %v542
    %v544 = vpop.f32.mrf.mxu0
    %545 = vmatprep.mubr.bf16.mxu0 0
    %546 = vmatmul.mubr.bf16.gmra.mxu0 %v319
    %v547 = vpop.f32.mrf.mxu0
    %v548 = vadd.f32 %v98, %v547
    %v549 = vpop.f32.mrf.mxu0
    %v550 = vpop.f32.mrf.mxu0
    %v551 = vadd.f32 %v98, %v550
    %v552 = vpop.f32.mrf.mxu0
    %553 = vmatprep.mubr.bf16.mxu0 0
    %554 = vmatmul.mubr.bf16.gmra.mxu0 %v322
    %v555 = vpop.f32.mrf.mxu0
    %v556 = vadd.f32 %v98, %v555
    %v557 = vpop.f32.mrf.mxu0
    %v558 = vpop.f32.mrf.mxu0
    %v559 = vadd.f32 %v98, %v558
    %v560 = vpop.f32.mrf.mxu0
    %561 = vmatprep.mubr.bf16.mxu0 0
    %562 = vmatmul.mubr.bf16.gmra.mxu0 %v325
    %v563 = vpop.f32.mrf.mxu0
    %v564 = vadd.f32 %v98, %v563
    %v565 = vpop.f32.mrf.mxu0
    %v566 = vpop.f32.mrf.mxu0
    %v567 = vadd.f32 %v98, %v566
    %v568 = vpop.f32.mrf.mxu0
    %569 = vmatprep.mubr.bf16.mxu0 0
    %570 = vmatmul.mubr.bf16.gmra.mxu0 %v328
    %v571 = vpop.f32.mrf.mxu0
    %v572 = vadd.f32 %v98, %v571
    %v573 = vpop.f32.mrf.mxu0
    %v574 = vpop.f32.mrf.mxu0
    %v575 = vadd.f32 %v98, %v574
    %v576 = vpop.f32.mrf.mxu0
    %577 = vmatprep.mubr.bf16.mxu0 0
    %578 = vmatmul.mubr.bf16.gmra.mxu0 %v331
    %v579 = vpop.f32.mrf.mxu0
    %v580 = vadd.f32 %v98, %v579
    %v581 = vpop.f32.mrf.mxu0
    %v582 = vpop.f32.mrf.mxu0
    %v583 = vadd.f32 %v98, %v582
    %v584 = vpop.f32.mrf.mxu0
    %585 = vmatprep.mubr.bf16.mxu0 0
    %586 = vmatmul.mubr.bf16.gmra.mxu0 %v334
    %v587 = vpop.f32.mrf.mxu0
    %v588 = vadd.f32 %v98, %v587
    %v589 = vpop.f32.mrf.mxu0
    %v590 = vpop.f32.mrf.mxu0
    %v591 = vadd.f32 %v98, %v590
    %v592 = vpop.f32.mrf.mxu0
    %593 = vmatprep.mubr.bf16.mxu0 0
    %594 = vmatmul.mubr.bf16.gmra.mxu0 %v337
    %v595 = vpop.f32.mrf.mxu0
    %v596 = vadd.f32 %v98, %v595
    %v597 = vpop.f32.mrf.mxu0
    %v598 = vpop.f32.mrf.mxu0
    %v599 = vadd.f32 %v98, %v598
    %v600 = vpop.f32.mrf.mxu0
    %601 = vmatprep.mubr.bf16.mxu0 0
    %602 = vmatmul.mubr.bf16.gmra.mxu0 %v340
    %v603 = vpop.f32.mrf.mxu0
    %v604 = vadd.f32 %v98, %v603
    %v605 = vpop.f32.mrf.mxu0
    %v606 = vpop.f32.mrf.mxu0
    %v607 = vadd.f32 %v98, %v606
    %v608 = vpop.f32.mrf.mxu0
    %609 = vmatprep.mubr.bf16.mxu0 0
    %610 = vmatmul.mubr.bf16.gmra.mxu0 %v343
    %v611 = vpop.f32.mrf.mxu0
    %v612 = vadd.f32 %v98, %v611
    %v613 = vpop.f32.mrf.mxu0
    %v614 = vpop.f32.mrf.mxu0
    %v615 = vadd.f32 %v98, %v614
    %v616 = vpop.f32.mrf.mxu0
    %617 = vmatprep.mubr.bf16.mxu0 0
    %618 = vmatmul.mubr.bf16.gmra.mxu0 %v346
    %v619 = vpop.f32.mrf.mxu0
    %v620 = vadd.f32 %v98, %v619
    %v621 = vpop.f32.mrf.mxu0
    %v622 = vpop.f32.mrf.mxu0
    %v623 = vadd.f32 %v98, %v622
    %v624 = vpop.f32.mrf.mxu0
    %625 = vmatprep.mubr.bf16.mxu0 0
    %626 = vmatmul.mubr.bf16.gmra.mxu0 %v349
    %v627 = vpop.f32.mrf.mxu0
    %v628 = vadd.f32 %v98, %v627
    %v629 = vpop.f32.mrf.mxu0
    %v630 = vpop.f32.mrf.mxu0
    %v631 = vadd.f32 %v98, %v630
    %v632 = vpop.f32.mrf.mxu0
    %633 = vmatprep.mubr.bf16.mxu0 0
    %634 = vmatmul.mubr.bf16.gmra.mxu0 %v352
    %v635 = vpop.f32.mrf.mxu0
    %v636 = vadd.f32 %v98, %v635
    %v637 = vpop.f32.mrf.mxu0
    %v638 = vpop.f32.mrf.mxu0
    %v639 = vadd.f32 %v98, %v638
    %v640 = vpop.f32.mrf.mxu0
    %641 = vmatprep.mubr.bf16.mxu0 0
    %642 = vmatmul.mubr.bf16.gmra.mxu0 %v355
    %v643 = vpop.f32.mrf.mxu0
    %v644 = vadd.f32 %v98, %v643
    %v645 = vpop.f32.mrf.mxu0
    %v646 = vpop.f32.mrf.mxu0
    %v647 = vadd.f32 %v98, %v646
    %v648 = vpop.f32.mrf.mxu0
    %649 = vdwg.mxu0
    %v650 = vmax.f32 %v396, 0.0
    %v651 = vmax.f32 %v399, 0.0
    %v652 = vmax.f32 %v404, 0.0
    %v653 = vmax.f32 %v407, 0.0
    %v654 = vmax.f32 %v412, 0.0
    %v655 = vmax.f32 %v415, 0.0
    %v656 = vmax.f32 %v420, 0.0
    %v657 = vmax.f32 %v423, 0.0
    %v658 = vmax.f32 %v428, 0.0
    %v659 = vmax.f32 %v431, 0.0
    %v660 = vmax.f32 %v436, 0.0
    %v661 = vmax.f32 %v439, 0.0
    %v662 = vmax.f32 %v444, 0.0
    %v663 = vmax.f32 %v447, 0.0
    %v664 = vmax.f32 %v452, 0.0
    %v665 = vmax.f32 %v455, 0.0
    %v666 = vmax.f32 %v460, 0.0
    %v667 = vmax.f32 %v463, 0.0
    %v668 = vmax.f32 %v468, 0.0
    %v669 = vmax.f32 %v471, 0.0
    %v670 = vmax.f32 %v476, 0.0
    %v671 = vmax.f32 %v479, 0.0
    %v672 = vmax.f32 %v484, 0.0
    %v673 = vmax.f32 %v487, 0.0
    %v674 = vmax.f32 %v492, 0.0
    %v675 = vmax.f32 %v495, 0.0
    %v676 = vmax.f32 %v500, 0.0
    %v677 = vmax.f32 %v503, 0.0
    %v678 = vmax.f32 %v508, 0.0
    %v679 = vmax.f32 %v511, 0.0
    %v680 = vmax.f32 %v516, 0.0
    %v681 = vmax.f32 %v519, 0.0
    %v682 = vmax.f32 %v524, 0.0
    %v683 = vmax.f32 %v527, 0.0
    %v684 = vmax.f32 %v532, 0.0
    %v685 = vmax.f32 %v535, 0.0
    %v686 = vmax.f32 %v540, 0.0
    %v687 = vmax.f32 %v543, 0.0
    %v688 = vmax.f32 %v548, 0.0
    %v689 = vmax.f32 %v551, 0.0
    %v690 = vmax.f32 %v556, 0.0
    %v691 = vmax.f32 %v559, 0.0
    %v692 = vmax.f32 %v564, 0.0
    %v693 = vmax.f32 %v567, 0.0
    %v694 = vmax.f32 %v572, 0.0
    %v695 = vmax.f32 %v575, 0.0
    %v696 = vmax.f32 %v580, 0.0
    %v697 = vmax.f32 %v583, 0.0
    %v698 = vmax.f32 %v588, 0.0
    %v699 = vmax.f32 %v591, 0.0
    %v700 = vmax.f32 %v596, 0.0
    %v701 = vmax.f32 %v599, 0.0
    %v702 = vmax.f32 %v604, 0.0
    %v703 = vmax.f32 %v607, 0.0
    %v704 = vmax.f32 %v612, 0.0
    %v705 = vmax.f32 %v615, 0.0
    %v706 = vmax.f32 %v620, 0.0
    %v707 = vmax.f32 %v623, 0.0
    %v708 = vmax.f32 %v628, 0.0
    %v709 = vmax.f32 %v631, 0.0
    %v710 = vmax.f32 %v636, 0.0
    %v711 = vmax.f32 %v639, 0.0
    %v712 = vmax.f32 %v644, 0.0
    %v713 = vmax.f32 %v647, 0.0
    %v714 = vpack.c.bf16 %v651, %v650
    %v715 = vpack.c.bf16 %v653, %v652
    %v716 = vpack.c.bf16 %v655, %v654
    %v717 = vpack.c.bf16 %v657, %v656
    %v718 = vpack.c.bf16 %v659, %v658
    %v719 = vpack.c.bf16 %v661, %v660
    %v720 = vpack.c.bf16 %v663, %v662
    %v721 = vpack.c.bf16 %v665, %v664
    %v722 = vpack.c.bf16 %v667, %v666
    %v723 = vpack.c.bf16 %v669, %v668
    %v724 = vpack.c.bf16 %v671, %v670
    %v725 = vpack.c.bf16 %v673, %v672
    %v726 = vpack.c.bf16 %v675, %v674
    %v727 = vpack.c.bf16 %v677, %v676
    %v728 = vpack.c.bf16 %v679, %v678
    %v729 = vpack.c.bf16 %v681, %v680
    %v730 = vpack.c.bf16 %v683, %v682
    %v731 = vpack.c.bf16 %v685, %v684
    %v732 = vpack.c.bf16 %v687, %v686
    %v733 = vpack.c.bf16 %v689, %v688
    %v734 = vpack.c.bf16 %v691, %v690
    %v735 = vpack.c.bf16 %v693, %v692
    %v736 = vpack.c.bf16 %v695, %v694
    %v737 = vpack.c.bf16 %v697, %v696
    %v738 = vpack.c.bf16 %v699, %v698
    %v739 = vpack.c.bf16 %v701, %v700
    %v740 = vpack.c.bf16 %v703, %v702
    %v741 = vpack.c.bf16 %v705, %v704
    %v742 = vpack.c.bf16 %v707, %v706
    %v743 = vpack.c.bf16 %v709, %v708
    %v744 = vpack.c.bf16 %v711, %v710
    %v745 = vpack.c.bf16 %v713, %v712
    %v746 = vld [vmem:[%s3] sm:$0xf]
    %v747 = vld [vmem:[%s3 + $0x4] sm:$0xf]
    %v748 = vld [vmem:[%s3 + $0x8] sm:$0xf]
    %v749 = vld [vmem:[%s3 + $0xc] sm:$0xf]
    %v750 = vld [vmem:[%s3 + $0x10] sm:$0xf]
    %v751 = vld [vmem:[%s3 + $0x14] sm:$0xf]
    %v752 = vld [vmem:[%s3 + $0x18] sm:$0xf]
    %v753 = vld [vmem:[%s3 + $0x1c] sm:$0xf]
    %v754 = vld [vmem:[%s4] sm:$0x1]
    %v756 = vlaneseq
    %v757 = vshrl.u32 %v756, 7
    %v758 = vsub.s32 0, %v757
    %v759 = vrot.slane %v754, %v758
    %v769 = vunpack.c.l.b16 %v746
    %v770 = vunpack.c.l.b16 %v747
    %v771 = vunpack.c.l.b16 %v748
    %v772 = vunpack.c.l.b16 %v749
    %v773 = vunpack.c.l.b16 %v750
    %v774 = vunpack.c.l.b16 %v751
    %v775 = vunpack.c.l.b16 %v752
    %v776 = vunpack.c.l.b16 %v753
    %v777 = vpack.c.b16 %v770, %v769
    %v778 = vpack.c.b16 %v772, %v771
    %v779 = vpack.c.b16 %v774, %v773
    %v780 = vpack.c.b16 %v776, %v775
    %vm785 = vcmask 523264
    %v787 = vsel %vm785, %v714, 0
    %v790 = vsel %vm785, %v715, 0
    %v793 = vsel %vm785, %v716, 0
    %v796 = vsel %vm785, %v717, 0
    %v799 = vsel %vm785, %v718, 0
    %v802 = vsel %vm785, %v719, 0
    %v805 = vsel %vm785, %v720, 0
    %v808 = vsel %vm785, %v721, 0
    %v811 = vsel %vm785, %v722, 0
    %v814 = vsel %vm785, %v723, 0
    %v817 = vsel %vm785, %v724, 0
    %v820 = vsel %vm785, %v725, 0
    %v823 = vsel %vm785, %v726, 0
    %v826 = vsel %vm785, %v727, 0
    %v829 = vsel %vm785, %v728, 0
    %v832 = vsel %vm785, %v729, 0
    %v835 = vsel %vm785, %v730, 0
    %v838 = vsel %vm785, %v731, 0
    %v841 = vsel %vm785, %v732, 0
    %v844 = vsel %vm785, %v733, 0
    %v847 = vsel %vm785, %v734, 0
    %v850 = vsel %vm785, %v735, 0
    %v853 = vsel %vm785, %v736, 0
    %v856 = vsel %vm785, %v737, 0
    %v859 = vsel %vm785, %v738, 0
    %v862 = vsel %vm785, %v739, 0
    %v865 = vsel %vm785, %v740, 0
    %v868 = vsel %vm785, %v741, 0
    %v871 = vsel %vm785, %v742, 0
    %v874 = vsel %vm785, %v743, 0
    %v877 = vsel %vm785, %v744, 0
    %v880 = vsel %vm785, %v745, 0
    %882 = vmatprep.subr.bf16.mxu0 0
    %883 = vmatpush1.bf16.msra.mxu0 0
    %884 = vmatprep.subr.bf16.mxu0 0
    %885 = vmatpush1.bf16.msra.mxu0 0
    %886 = vmatprep.subr.bf16.mxu0 0
    %887 = vmatpush1.bf16.msra.mxu0 0
    %888 = vmatprep.subr.bf16.mxu0 0
    %889 = vmatpush1.bf16.msra.mxu0 0
    %890 = vmatprep.subr.bf16.mxu0 0
    %891 = vmatpush1.bf16.msra.mxu0 %v780
    %892 = vmatprep.subr.bf16.mxu0 0
    %893 = vmatpush1.bf16.msra.mxu0 %v779
    %894 = vmatprep.subr.bf16.mxu0 0
    %895 = vmatpush1.bf16.msra.mxu0 %v778
    %896 = vmatprep.subr.bf16.mxu0 0
    %897 = vmatpush1.bf16.msra.mxu0 %v777
    %898 = vmatprep.subr.bf16.mxu0 0
    %899 = vmatpush2.bf16.msra.mxu0 0
    %900 = vmatprep.subr.bf16.mxu0 0
    %901 = vmatpush2.bf16.msra.mxu0 0
    %902 = vmatprep.subr.bf16.mxu0 0
    %903 = vmatpush2.bf16.msra.mxu0 0
    %904 = vmatprep.subr.bf16.mxu0 0
    %905 = vmatpush2.bf16.msra.mxu0 0
    %906 = vmatprep.subr.bf16.mxu0 0
    %907 = vmatpush2.bf16.msra.mxu0 0
    %908 = vmatprep.subr.bf16.mxu0 0
    %909 = vmatpush2.bf16.msra.mxu0 0
    %910 = vmatprep.subr.bf16.mxu0 0
    %911 = vmatpush2.bf16.msra.mxu0 0
    %912 = vmatprep.subr.bf16.mxu0 0
    %913 = vmatpush2.bf16.msra.mxu0 0
    %914 = vmatprep.mubr.bf16.mxu0 0
    %915 = vmatmul.mubr.bf16.gmra.mxu0 %v787
    %v916 = vpop.f32.mrf.mxu0
    %v917 = vadd.f32 %v759, %v916
    %v918 = vpop.f32.mrf.mxu0
    %v919 = vpop.f32.mrf.mxu0
    %v920 = vadd.f32 %v759, %v919
    %v921 = vpop.f32.mrf.mxu0
    %922 = vmatprep.mubr.bf16.mxu0 0
    %923 = vmatmul.mubr.bf16.gmra.mxu0 %v790
    %v924 = vpop.f32.mrf.mxu0
    %v925 = vadd.f32 %v759, %v924
    %v926 = vpop.f32.mrf.mxu0
    %v927 = vpop.f32.mrf.mxu0
    %v928 = vadd.f32 %v759, %v927
    %v929 = vpop.f32.mrf.mxu0
    %930 = vmatprep.mubr.bf16.mxu0 0
    %931 = vmatmul.mubr.bf16.gmra.mxu0 %v793
    %v932 = vpop.f32.mrf.mxu0
    %v933 = vadd.f32 %v759, %v932
    %v934 = vpop.f32.mrf.mxu0
    %v935 = vpop.f32.mrf.mxu0
    %v936 = vadd.f32 %v759, %v935
    %v937 = vpop.f32.mrf.mxu0
    %938 = vmatprep.mubr.bf16.mxu0 0
    %939 = vmatmul.mubr.bf16.gmra.mxu0 %v796
    %v940 = vpop.f32.mrf.mxu0
    %v941 = vadd.f32 %v759, %v940
    %v942 = vpop.f32.mrf.mxu0
    %v943 = vpop.f32.mrf.mxu0
    %v944 = vadd.f32 %v759, %v943
    %v945 = vpop.f32.mrf.mxu0
    %946 = vmatprep.mubr.bf16.mxu0 0
    %947 = vmatmul.mubr.bf16.gmra.mxu0 %v799
    %v948 = vpop.f32.mrf.mxu0
    %v949 = vadd.f32 %v759, %v948
    %v950 = vpop.f32.mrf.mxu0
    %v951 = vpop.f32.mrf.mxu0
    %v952 = vadd.f32 %v759, %v951
    %v953 = vpop.f32.mrf.mxu0
    %954 = vmatprep.mubr.bf16.mxu0 0
    %955 = vmatmul.mubr.bf16.gmra.mxu0 %v802
    %v956 = vpop.f32.mrf.mxu0
    %v957 = vadd.f32 %v759, %v956
    %v958 = vpop.f32.mrf.mxu0
    %v959 = vpop.f32.mrf.mxu0
    %v960 = vadd.f32 %v759, %v959
    %v961 = vpop.f32.mrf.mxu0
    %962 = vmatprep.mubr.bf16.mxu0 0
    %963 = vmatmul.mubr.bf16.gmra.mxu0 %v805
    %v964 = vpop.f32.mrf.mxu0
    %v965 = vadd.f32 %v759, %v964
    %v966 = vpop.f32.mrf.mxu0
    %v967 = vpop.f32.mrf.mxu0
    %v968 = vadd.f32 %v759, %v967
    %v969 = vpop.f32.mrf.mxu0
    %970 = vmatprep.mubr.bf16.mxu0 0
    %971 = vmatmul.mubr.bf16.gmra.mxu0 %v808
    %v972 = vpop.f32.mrf.mxu0
    %v973 = vadd.f32 %v759, %v972
    %v974 = vpop.f32.mrf.mxu0
    %v975 = vpop.f32.mrf.mxu0
    %v976 = vadd.f32 %v759, %v975
    %v977 = vpop.f32.mrf.mxu0
    %978 = vmatprep.mubr.bf16.mxu0 0
    %979 = vmatmul.mubr.bf16.gmra.mxu0 %v811
    %v980 = vpop.f32.mrf.mxu0
    %v981 = vadd.f32 %v759, %v980
    %v982 = vpop.f32.mrf.mxu0
    %v983 = vpop.f32.mrf.mxu0
    %v984 = vadd.f32 %v759, %v983
    %v985 = vpop.f32.mrf.mxu0
    %986 = vmatprep.mubr.bf16.mxu0 0
    %987 = vmatmul.mubr.bf16.gmra.mxu0 %v814
    %v988 = vpop.f32.mrf.mxu0
    %v989 = vadd.f32 %v759, %v988
    %v990 = vpop.f32.mrf.mxu0
    %v991 = vpop.f32.mrf.mxu0
    %v992 = vadd.f32 %v759, %v991
    %v993 = vpop.f32.mrf.mxu0
    %994 = vmatprep.mubr.bf16.mxu0 0
    %995 = vmatmul.mubr.bf16.gmra.mxu0 %v817
    %v996 = vpop.f32.mrf.mxu0
    %v997 = vadd.f32 %v759, %v996
    %v998 = vpop.f32.mrf.mxu0
    %v999 = vpop.f32.mrf.mxu0
    %v1000 = vadd.f32 %v759, %v999
    %v1001 = vpop.f32.mrf.mxu0
    %1002 = vmatprep.mubr.bf16.mxu0 0
    %1003 = vmatmul.mubr.bf16.gmra.mxu0 %v820
    %v1004 = vpop.f32.mrf.mxu0
    %v1005 = vadd.f32 %v759, %v1004
    %v1006 = vpop.f32.mrf.mxu0
    %v1007 = vpop.f32.mrf.mxu0
    %v1008 = vadd.f32 %v759, %v1007
    %v1009 = vpop.f32.mrf.mxu0
    %1010 = vmatprep.mubr.bf16.mxu0 0
    %1011 = vmatmul.mubr.bf16.gmra.mxu0 %v823
    %v1012 = vpop.f32.mrf.mxu0
    %v1013 = vadd.f32 %v759, %v1012
    %v1014 = vpop.f32.mrf.mxu0
    %v1015 = vpop.f32.mrf.mxu0
    %v1016 = vadd.f32 %v759, %v1015
    %v1017 = vpop.f32.mrf.mxu0
    %1018 = vmatprep.mubr.bf16.mxu0 0
    %1019 = vmatmul.mubr.bf16.gmra.mxu0 %v826
    %v1020 = vpop.f32.mrf.mxu0
    %v1021 = vadd.f32 %v759, %v1020
    %v1022 = vpop.f32.mrf.mxu0
    %v1023 = vpop.f32.mrf.mxu0
    %v1024 = vadd.f32 %v759, %v1023
    %v1025 = vpop.f32.mrf.mxu0
    %1026 = vmatprep.mubr.bf16.mxu0 0
    %1027 = vmatmul.mubr.bf16.gmra.mxu0 %v829
    %v1028 = vpop.f32.mrf.mxu0
    %v1029 = vadd.f32 %v759, %v1028
    %v1030 = vpop.f32.mrf.mxu0
    %v1031 = vpop.f32.mrf.mxu0
    %v1032 = vadd.f32 %v759, %v1031
    %v1033 = vpop.f32.mrf.mxu0
    %1034 = vmatprep.mubr.bf16.mxu0 0
    %1035 = vmatmul.mubr.bf16.gmra.mxu0 %v832
    %v1036 = vpop.f32.mrf.mxu0
    %v1037 = vadd.f32 %v759, %v1036
    %v1038 = vpop.f32.mrf.mxu0
    %v1039 = vpop.f32.mrf.mxu0
    %v1040 = vadd.f32 %v759, %v1039
    %v1041 = vpop.f32.mrf.mxu0
    %1042 = vmatprep.mubr.bf16.mxu0 0
    %1043 = vmatmul.mubr.bf16.gmra.mxu0 %v835
    %v1044 = vpop.f32.mrf.mxu0
    %v1045 = vadd.f32 %v759, %v1044
    %v1046 = vpop.f32.mrf.mxu0
    %v1047 = vpop.f32.mrf.mxu0
    %v1048 = vadd.f32 %v759, %v1047
    %v1049 = vpop.f32.mrf.mxu0
    %1050 = vmatprep.mubr.bf16.mxu0 0
    %1051 = vmatmul.mubr.bf16.gmra.mxu0 %v838
    %v1052 = vpop.f32.mrf.mxu0
    %v1053 = vadd.f32 %v759, %v1052
    %v1054 = vpop.f32.mrf.mxu0
    %v1055 = vpop.f32.mrf.mxu0
    %v1056 = vadd.f32 %v759, %v1055
    %v1057 = vpop.f32.mrf.mxu0
    %1058 = vmatprep.mubr.bf16.mxu0 0
    %1059 = vmatmul.mubr.bf16.gmra.mxu0 %v841
    %v1060 = vpop.f32.mrf.mxu0
    %v1061 = vadd.f32 %v759, %v1060
    %v1062 = vpop.f32.mrf.mxu0
    %v1063 = vpop.f32.mrf.mxu0
    %v1064 = vadd.f32 %v759, %v1063
    %v1065 = vpop.f32.mrf.mxu0
    %1066 = vmatprep.mubr.bf16.mxu0 0
    %1067 = vmatmul.mubr.bf16.gmra.mxu0 %v844
    %v1068 = vpop.f32.mrf.mxu0
    %v1069 = vadd.f32 %v759, %v1068
    %v1070 = vpop.f32.mrf.mxu0
    %v1071 = vpop.f32.mrf.mxu0
    %v1072 = vadd.f32 %v759, %v1071
    %v1073 = vpop.f32.mrf.mxu0
    %1074 = vmatprep.mubr.bf16.mxu0 0
    %1075 = vmatmul.mubr.bf16.gmra.mxu0 %v847
    %v1076 = vpop.f32.mrf.mxu0
    %v1077 = vadd.f32 %v759, %v1076
    %v1078 = vpop.f32.mrf.mxu0
    %v1079 = vpop.f32.mrf.mxu0
    %v1080 = vadd.f32 %v759, %v1079
    %v1081 = vpop.f32.mrf.mxu0
    %1082 = vmatprep.mubr.bf16.mxu0 0
    %1083 = vmatmul.mubr.bf16.gmra.mxu0 %v850
    %v1084 = vpop.f32.mrf.mxu0
    %v1085 = vadd.f32 %v759, %v1084
    %v1086 = vpop.f32.mrf.mxu0
    %v1087 = vpop.f32.mrf.mxu0
    %v1088 = vadd.f32 %v759, %v1087
    %v1089 = vpop.f32.mrf.mxu0
    %1090 = vmatprep.mubr.bf16.mxu0 0
    %1091 = vmatmul.mubr.bf16.gmra.mxu0 %v853
    %v1092 = vpop.f32.mrf.mxu0
    %v1093 = vadd.f32 %v759, %v1092
    %v1094 = vpop.f32.mrf.mxu0
    %v1095 = vpop.f32.mrf.mxu0
    %v1096 = vadd.f32 %v759, %v1095
    %v1097 = vpop.f32.mrf.mxu0
    %1098 = vmatprep.mubr.bf16.mxu0 0
    %1099 = vmatmul.mubr.bf16.gmra.mxu0 %v856
    %v1100 = vpop.f32.mrf.mxu0
    %v1101 = vadd.f32 %v759, %v1100
    %v1102 = vpop.f32.mrf.mxu0
    %v1103 = vpop.f32.mrf.mxu0
    %v1104 = vadd.f32 %v759, %v1103
    %v1105 = vpop.f32.mrf.mxu0
    %1106 = vmatprep.mubr.bf16.mxu0 0
    %1107 = vmatmul.mubr.bf16.gmra.mxu0 %v859
    %v1108 = vpop.f32.mrf.mxu0
    %v1109 = vadd.f32 %v759, %v1108
    %v1110 = vpop.f32.mrf.mxu0
    %v1111 = vpop.f32.mrf.mxu0
    %v1112 = vadd.f32 %v759, %v1111
    %v1113 = vpop.f32.mrf.mxu0
    %1114 = vmatprep.mubr.bf16.mxu0 0
    %1115 = vmatmul.mubr.bf16.gmra.mxu0 %v862
    %v1116 = vpop.f32.mrf.mxu0
    %v1117 = vadd.f32 %v759, %v1116
    %v1118 = vpop.f32.mrf.mxu0
    %v1119 = vpop.f32.mrf.mxu0
    %v1120 = vadd.f32 %v759, %v1119
    %v1121 = vpop.f32.mrf.mxu0
    %1122 = vmatprep.mubr.bf16.mxu0 0
    %1123 = vmatmul.mubr.bf16.gmra.mxu0 %v865
    %v1124 = vpop.f32.mrf.mxu0
    %v1125 = vadd.f32 %v759, %v1124
    %v1126 = vpop.f32.mrf.mxu0
    %v1127 = vpop.f32.mrf.mxu0
    %v1128 = vadd.f32 %v759, %v1127
    %v1129 = vpop.f32.mrf.mxu0
    %1130 = vmatprep.mubr.bf16.mxu0 0
    %1131 = vmatmul.mubr.bf16.gmra.mxu0 %v868
    %v1132 = vpop.f32.mrf.mxu0
    %v1133 = vadd.f32 %v759, %v1132
    %v1134 = vpop.f32.mrf.mxu0
    %v1135 = vpop.f32.mrf.mxu0
    %v1136 = vadd.f32 %v759, %v1135
    %v1137 = vpop.f32.mrf.mxu0
    %1138 = vmatprep.mubr.bf16.mxu0 0
    %1139 = vmatmul.mubr.bf16.gmra.mxu0 %v871
    %v1140 = vpop.f32.mrf.mxu0
    %v1141 = vadd.f32 %v759, %v1140
    %v1142 = vpop.f32.mrf.mxu0
    %v1143 = vpop.f32.mrf.mxu0
    %v1144 = vadd.f32 %v759, %v1143
    %v1145 = vpop.f32.mrf.mxu0
    %1146 = vmatprep.mubr.bf16.mxu0 0
    %1147 = vmatmul.mubr.bf16.gmra.mxu0 %v874
    %v1148 = vpop.f32.mrf.mxu0
    %v1149 = vadd.f32 %v759, %v1148
    %v1150 = vpop.f32.mrf.mxu0
    %v1151 = vpop.f32.mrf.mxu0
    %v1152 = vadd.f32 %v759, %v1151
    %v1153 = vpop.f32.mrf.mxu0
    %1154 = vmatprep.mubr.bf16.mxu0 0
    %1155 = vmatmul.mubr.bf16.gmra.mxu0 %v877
    %v1156 = vpop.f32.mrf.mxu0
    %v1157 = vadd.f32 %v759, %v1156
    %v1158 = vpop.f32.mrf.mxu0
    %v1159 = vpop.f32.mrf.mxu0
    %v1160 = vadd.f32 %v759, %v1159
    %v1161 = vpop.f32.mrf.mxu0
    %1162 = vmatprep.mubr.bf16.mxu0 0
    %1163 = vmatmul.mubr.bf16.gmra.mxu0 %v880
    %v1164 = vpop.f32.mrf.mxu0
    %v1165 = vadd.f32 %v759, %v1164
    %v1166 = vpop.f32.mrf.mxu0
    %v1167 = vpop.f32.mrf.mxu0
    %v1168 = vadd.f32 %v759, %v1167
    %v1169 = vpop.f32.mrf.mxu0
    %1170 = vdwg.mxu0
    %v1171 = vmax.f32 %v917, 0.0
    %v1172 = vmax.f32 %v920, 0.0
    %v1173 = vmax.f32 %v925, 0.0
    %v1174 = vmax.f32 %v928, 0.0
    %v1175 = vmax.f32 %v933, 0.0
    %v1176 = vmax.f32 %v936, 0.0
    %v1177 = vmax.f32 %v941, 0.0
    %v1178 = vmax.f32 %v944, 0.0
    %v1179 = vmax.f32 %v949, 0.0
    %v1180 = vmax.f32 %v952, 0.0
    %v1181 = vmax.f32 %v957, 0.0
    %v1182 = vmax.f32 %v960, 0.0
    %v1183 = vmax.f32 %v965, 0.0
    %v1184 = vmax.f32 %v968, 0.0
    %v1185 = vmax.f32 %v973, 0.0
    %v1186 = vmax.f32 %v976, 0.0
    %v1187 = vmax.f32 %v981, 0.0
    %v1188 = vmax.f32 %v984, 0.0
    %v1189 = vmax.f32 %v989, 0.0
    %v1190 = vmax.f32 %v992, 0.0
    %v1191 = vmax.f32 %v997, 0.0
    %v1192 = vmax.f32 %v1000, 0.0
    %v1193 = vmax.f32 %v1005, 0.0
    %v1194 = vmax.f32 %v1008, 0.0
    %v1195 = vmax.f32 %v1013, 0.0
    %v1196 = vmax.f32 %v1016, 0.0
    %v1197 = vmax.f32 %v1021, 0.0
    %v1198 = vmax.f32 %v1024, 0.0
    %v1199 = vmax.f32 %v1029, 0.0
    %v1200 = vmax.f32 %v1032, 0.0
    %v1201 = vmax.f32 %v1037, 0.0
    %v1202 = vmax.f32 %v1040, 0.0
    %v1203 = vmax.f32 %v1045, 0.0
    %v1204 = vmax.f32 %v1048, 0.0
    %v1205 = vmax.f32 %v1053, 0.0
    %v1206 = vmax.f32 %v1056, 0.0
    %v1207 = vmax.f32 %v1061, 0.0
    %v1208 = vmax.f32 %v1064, 0.0
    %v1209 = vmax.f32 %v1069, 0.0
    %v1210 = vmax.f32 %v1072, 0.0
    %v1211 = vmax.f32 %v1077, 0.0
    %v1212 = vmax.f32 %v1080, 0.0
    %v1213 = vmax.f32 %v1085, 0.0
    %v1214 = vmax.f32 %v1088, 0.0
    %v1215 = vmax.f32 %v1093, 0.0
    %v1216 = vmax.f32 %v1096, 0.0
    %v1217 = vmax.f32 %v1101, 0.0
    %v1218 = vmax.f32 %v1104, 0.0
    %v1219 = vmax.f32 %v1109, 0.0
    %v1220 = vmax.f32 %v1112, 0.0
    %v1221 = vmax.f32 %v1117, 0.0
    %v1222 = vmax.f32 %v1120, 0.0
    %v1223 = vmax.f32 %v1125, 0.0
    %v1224 = vmax.f32 %v1128, 0.0
    %v1225 = vmax.f32 %v1133, 0.0
    %v1226 = vmax.f32 %v1136, 0.0
    %v1227 = vmax.f32 %v1141, 0.0
    %v1228 = vmax.f32 %v1144, 0.0
    %v1229 = vmax.f32 %v1149, 0.0
    %v1230 = vmax.f32 %v1152, 0.0
    %v1231 = vmax.f32 %v1157, 0.0
    %v1232 = vmax.f32 %v1160, 0.0
    %v1233 = vmax.f32 %v1165, 0.0
    %v1234 = vmax.f32 %v1168, 0.0
    %v1235 = vpack.c.bf16 %v1172, %v1171
    %v1236 = vpack.c.bf16 %v1174, %v1173
    %v1237 = vpack.c.bf16 %v1176, %v1175
    %v1238 = vpack.c.bf16 %v1178, %v1177
    %v1239 = vpack.c.bf16 %v1180, %v1179
    %v1240 = vpack.c.bf16 %v1182, %v1181
    %v1241 = vpack.c.bf16 %v1184, %v1183
    %v1242 = vpack.c.bf16 %v1186, %v1185
    %v1243 = vpack.c.bf16 %v1188, %v1187
    %v1244 = vpack.c.bf16 %v1190, %v1189
    %v1245 = vpack.c.bf16 %v1192, %v1191
    %v1246 = vpack.c.bf16 %v1194, %v1193
    %v1247 = vpack.c.bf16 %v1196, %v1195
    %v1248 = vpack.c.bf16 %v1198, %v1197
    %v1249 = vpack.c.bf16 %v1200, %v1199
    %v1250 = vpack.c.bf16 %v1202, %v1201
    %v1251 = vpack.c.bf16 %v1204, %v1203
    %v1252 = vpack.c.bf16 %v1206, %v1205
    %v1253 = vpack.c.bf16 %v1208, %v1207
    %v1254 = vpack.c.bf16 %v1210, %v1209
    %v1255 = vpack.c.bf16 %v1212, %v1211
    %v1256 = vpack.c.bf16 %v1214, %v1213
    %v1257 = vpack.c.bf16 %v1216, %v1215
    %v1258 = vpack.c.bf16 %v1218, %v1217
    %v1259 = vpack.c.bf16 %v1220, %v1219
    %v1260 = vpack.c.bf16 %v1222, %v1221
    %v1261 = vpack.c.bf16 %v1224, %v1223
    %v1262 = vpack.c.bf16 %v1226, %v1225
    %v1263 = vpack.c.bf16 %v1228, %v1227
    %v1264 = vpack.c.bf16 %v1230, %v1229
    %v1265 = vpack.c.bf16 %v1232, %v1231
    %v1266 = vpack.c.bf16 %v1234, %v1233
    %v1267 = vld [vmem:[%s5] sm:$0xff]
    %v1268 = vld [vmem:[%s5 + $0x8] sm:$0xff]
    %v1269 = vld [vmem:[%s5 + $0x10] sm:$0xff]
    %v1270 = vld [vmem:[%s5 + $0x18] sm:$0xff]
    %v1271 = vld [vmem:[%s5 + $0x20] sm:$0xff]
    %v1272 = vld [vmem:[%s5 + $0x28] sm:$0xff]
    %v1273 = vld [vmem:[%s5 + $0x30] sm:$0xff]
    %v1274 = vld [vmem:[%s5 + $0x38] sm:$0xff]
    %v1275 = vld [vmem:[%s5 + $0x40] sm:$0xff]
    %v1276 = vld [vmem:[%s5 + $0x48] sm:$0xff]
    %v1277 = vld [vmem:[%s5 + $0x50] sm:$0xff]
    %v1278 = vld [vmem:[%s5 + $0x58] sm:$0xff]
    %v1279 = vld [vmem:[%s5 + $0x60] sm:$0xff]
    %v1280 = vld [vmem:[%s5 + $0x68] sm:$0xff]
    %v1281 = vld [vmem:[%s5 + $0x70] sm:$0xff]
    %v1282 = vld [vmem:[%s5 + $0x78] sm:$0xff]
    %v1283 = vld [vmem:[%s6] sm:$0x3]
    %v1285 = vlaneseq
    %v1286 = vshrl.u32 %v1285, 7
    %v1287 = vsub.s32 0, %v1286
    %v1288 = vrot.slane %v1283, %v1287
    %v1289 = vlaneseq
    %v1290 = vshrl.u32 %v1289, 7
    %v1291 = vsub.s32 1, %v1290
    %v1292 = vrot.slane %v1283, %v1291
    %v1311 = vunpack.c.l.b16 %v1267
    %v1312 = vunpack.c.h.b16 %v1267
    %v1313 = vunpack.c.l.b16 %v1268
    %v1314 = vunpack.c.h.b16 %v1268
    %v1315 = vunpack.c.l.b16 %v1269
    %v1316 = vunpack.c.h.b16 %v1269
    %v1317 = vunpack.c.l.b16 %v1270
    %v1318 = vunpack.c.h.b16 %v1270
    %v1319 = vunpack.c.l.b16 %v1271
    %v1320 = vunpack.c.h.b16 %v1271
    %v1321 = vunpack.c.l.b16 %v1272
    %v1322 = vunpack.c.h.b16 %v1272
    %v1323 = vunpack.c.l.b16 %v1273
    %v1324 = vunpack.c.h.b16 %v1273
    %v1325 = vunpack.c.l.b16 %v1274
    %v1326 = vunpack.c.h.b16 %v1274
    %v1327 = vunpack.c.l.b16 %v1275
    %v1328 = vunpack.c.h.b16 %v1275
    %v1329 = vunpack.c.l.b16 %v1276
    %v1330 = vunpack.c.h.b16 %v1276
    %v1331 = vunpack.c.l.b16 %v1277
    %v1332 = vunpack.c.h.b16 %v1277
    %v1333 = vunpack.c.l.b16 %v1278
    %v1334 = vunpack.c.h.b16 %v1278
    %v1335 = vunpack.c.l.b16 %v1279
    %v1336 = vunpack.c.h.b16 %v1279
    %v1337 = vunpack.c.l.b16 %v1280
    %v1338 = vunpack.c.h.b16 %v1280
    %v1339 = vunpack.c.l.b16 %v1281
    %v1340 = vunpack.c.h.b16 %v1281
    %v1341 = vunpack.c.l.b16 %v1282
    %v1342 = vunpack.c.h.b16 %v1282
    %v1343 = vpack.c.b16 %v1313, %v1311
    %v1344 = vpack.c.b16 %v1314, %v1312
    %v1345 = vpack.c.b16 %v1317, %v1315
    %v1346 = vpack.c.b16 %v1318, %v1316
    %v1347 = vpack.c.b16 %v1321, %v1319
    %v1348 = vpack.c.b16 %v1322, %v1320
    %v1349 = vpack.c.b16 %v1325, %v1323
    %v1350 = vpack.c.b16 %v1326, %v1324
    %v1351 = vpack.c.b16 %v1329, %v1327
    %v1352 = vpack.c.b16 %v1330, %v1328
    %v1353 = vpack.c.b16 %v1333, %v1331
    %v1354 = vpack.c.b16 %v1334, %v1332
    %v1355 = vpack.c.b16 %v1337, %v1335
    %v1356 = vpack.c.b16 %v1338, %v1336
    %v1357 = vpack.c.b16 %v1341, %v1339
    %v1358 = vpack.c.b16 %v1342, %v1340
    %1375 = vmatprep.subr.bf16.mxu0 %v1358
    %1376 = vmatpush1.bf16.msra.mxu0 %v1357
    %1377 = vmatprep.subr.bf16.mxu0 %v1356
    %1378 = vmatpush1.bf16.msra.mxu0 %v1355
    %1379 = vmatprep.subr.bf16.mxu0 %v1354
    %1380 = vmatpush1.bf16.msra.mxu0 %v1353
    %1381 = vmatprep.subr.bf16.mxu0 %v1352
    %1382 = vmatpush1.bf16.msra.mxu0 %v1351
    %1383 = vmatprep.subr.bf16.mxu0 %v1350
    %1384 = vmatpush1.bf16.msra.mxu0 %v1349
    %1385 = vmatprep.subr.bf16.mxu0 %v1348
    %1386 = vmatpush1.bf16.msra.mxu0 %v1347
    %1387 = vmatprep.subr.bf16.mxu0 %v1346
    %1388 = vmatpush1.bf16.msra.mxu0 %v1345
    %1389 = vmatprep.subr.bf16.mxu0 %v1344
    %1390 = vmatpush1.bf16.msra.mxu0 %v1343
    %1391 = vmatprep.subr.bf16.mxu0 0
    %1392 = vmatpush2.bf16.msra.mxu0 0
    %1393 = vmatprep.subr.bf16.mxu0 0
    %1394 = vmatpush2.bf16.msra.mxu0 0
    %1395 = vmatprep.subr.bf16.mxu0 0
    %1396 = vmatpush2.bf16.msra.mxu0 0
    %1397 = vmatprep.subr.bf16.mxu0 0
    %1398 = vmatpush2.bf16.msra.mxu0 0
    %1399 = vmatprep.subr.bf16.mxu0 0
    %1400 = vmatpush2.bf16.msra.mxu0 0
    %1401 = vmatprep.subr.bf16.mxu0 0
    %1402 = vmatpush2.bf16.msra.mxu0 0
    %1403 = vmatprep.subr.bf16.mxu0 0
    %1404 = vmatpush2.bf16.msra.mxu0 0
    %1405 = vmatprep.subr.bf16.mxu0 0
    %1406 = vmatpush2.bf16.msra.mxu0 0
    %1407 = vmatprep.mubr.bf16.mxu0 0
    %1408 = vmatmul.mubr.bf16.gmra.mxu0 %v1235
    %v1409 = vpop.f32.mrf.mxu0
    %v1410 = vadd.f32 %v1288, %v1409
    %v1411 = vpop.f32.mrf.mxu0
    %v1412 = vadd.f32 %v1292, %v1411
    %v1413 = vpop.f32.mrf.mxu0
    %v1414 = vadd.f32 %v1288, %v1413
    %v1415 = vpop.f32.mrf.mxu0
    %v1416 = vadd.f32 %v1292, %v1415
    %1417 = vmatprep.mubr.bf16.mxu0 0
    %1418 = vmatmul.mubr.bf16.gmra.mxu0 %v1236
    %v1419 = vpop.f32.mrf.mxu0
    %v1420 = vadd.f32 %v1288, %v1419
    %v1421 = vpop.f32.mrf.mxu0
    %v1422 = vadd.f32 %v1292, %v1421
    %v1423 = vpop.f32.mrf.mxu0
    %v1424 = vadd.f32 %v1288, %v1423
    %v1425 = vpop.f32.mrf.mxu0
    %v1426 = vadd.f32 %v1292, %v1425
    %1427 = vmatprep.mubr.bf16.mxu0 0
    %1428 = vmatmul.mubr.bf16.gmra.mxu0 %v1237
    %v1429 = vpop.f32.mrf.mxu0
    %v1430 = vadd.f32 %v1288, %v1429
    %v1431 = vpop.f32.mrf.mxu0
    %v1432 = vadd.f32 %v1292, %v1431
    %v1433 = vpop.f32.mrf.mxu0
    %v1434 = vadd.f32 %v1288, %v1433
    %v1435 = vpop.f32.mrf.mxu0
    %v1436 = vadd.f32 %v1292, %v1435
    %1437 = vmatprep.mubr.bf16.mxu0 0
    %1438 = vmatmul.mubr.bf16.gmra.mxu0 %v1238
    %v1439 = vpop.f32.mrf.mxu0
    %v1440 = vadd.f32 %v1288, %v1439
    %v1441 = vpop.f32.mrf.mxu0
    %v1442 = vadd.f32 %v1292, %v1441
    %v1443 = vpop.f32.mrf.mxu0
    %v1444 = vadd.f32 %v1288, %v1443
    %v1445 = vpop.f32.mrf.mxu0
    %v1446 = vadd.f32 %v1292, %v1445
    %1447 = vmatprep.mubr.bf16.mxu0 0
    %1448 = vmatmul.mubr.bf16.gmra.mxu0 %v1239
    %v1449 = vpop.f32.mrf.mxu0
    %v1450 = vadd.f32 %v1288, %v1449
    %v1451 = vpop.f32.mrf.mxu0
    %v1452 = vadd.f32 %v1292, %v1451
    %v1453 = vpop.f32.mrf.mxu0
    %v1454 = vadd.f32 %v1288, %v1453
    %v1455 = vpop.f32.mrf.mxu0
    %v1456 = vadd.f32 %v1292, %v1455
    %1457 = vmatprep.mubr.bf16.mxu0 0
    %1458 = vmatmul.mubr.bf16.gmra.mxu0 %v1240
    %v1459 = vpop.f32.mrf.mxu0
    %v1460 = vadd.f32 %v1288, %v1459
    %v1461 = vpop.f32.mrf.mxu0
    %v1462 = vadd.f32 %v1292, %v1461
    %v1463 = vpop.f32.mrf.mxu0
    %v1464 = vadd.f32 %v1288, %v1463
    %v1465 = vpop.f32.mrf.mxu0
    %v1466 = vadd.f32 %v1292, %v1465
    %1467 = vmatprep.mubr.bf16.mxu0 0
    %1468 = vmatmul.mubr.bf16.gmra.mxu0 %v1241
    %v1469 = vpop.f32.mrf.mxu0
    %v1470 = vadd.f32 %v1288, %v1469
    %v1471 = vpop.f32.mrf.mxu0
    %v1472 = vadd.f32 %v1292, %v1471
    %v1473 = vpop.f32.mrf.mxu0
    %v1474 = vadd.f32 %v1288, %v1473
    %v1475 = vpop.f32.mrf.mxu0
    %v1476 = vadd.f32 %v1292, %v1475
    %1477 = vmatprep.mubr.bf16.mxu0 0
    %1478 = vmatmul.mubr.bf16.gmra.mxu0 %v1242
    %v1479 = vpop.f32.mrf.mxu0
    %v1480 = vadd.f32 %v1288, %v1479
    %v1481 = vpop.f32.mrf.mxu0
    %v1482 = vadd.f32 %v1292, %v1481
    %v1483 = vpop.f32.mrf.mxu0
    %v1484 = vadd.f32 %v1288, %v1483
    %v1485 = vpop.f32.mrf.mxu0
    %v1486 = vadd.f32 %v1292, %v1485
    %1487 = vmatprep.mubr.bf16.mxu0 0
    %1488 = vmatmul.mubr.bf16.gmra.mxu0 %v1243
    %v1489 = vpop.f32.mrf.mxu0
    %v1490 = vadd.f32 %v1288, %v1489
    %v1491 = vpop.f32.mrf.mxu0
    %v1492 = vadd.f32 %v1292, %v1491
    %v1493 = vpop.f32.mrf.mxu0
    %v1494 = vadd.f32 %v1288, %v1493
    %v1495 = vpop.f32.mrf.mxu0
    %v1496 = vadd.f32 %v1292, %v1495
    %1497 = vmatprep.mubr.bf16.mxu0 0
    %1498 = vmatmul.mubr.bf16.gmra.mxu0 %v1244
    %v1499 = vpop.f32.mrf.mxu0
    %v1500 = vadd.f32 %v1288, %v1499
    %v1501 = vpop.f32.mrf.mxu0
    %v1502 = vadd.f32 %v1292, %v1501
    %v1503 = vpop.f32.mrf.mxu0
    %v1504 = vadd.f32 %v1288, %v1503
    %v1505 = vpop.f32.mrf.mxu0
    %v1506 = vadd.f32 %v1292, %v1505
    %1507 = vmatprep.mubr.bf16.mxu0 0
    %1508 = vmatmul.mubr.bf16.gmra.mxu0 %v1245
    %v1509 = vpop.f32.mrf.mxu0
    %v1510 = vadd.f32 %v1288, %v1509
    %v1511 = vpop.f32.mrf.mxu0
    %v1512 = vadd.f32 %v1292, %v1511
    %v1513 = vpop.f32.mrf.mxu0
    %v1514 = vadd.f32 %v1288, %v1513
    %v1515 = vpop.f32.mrf.mxu0
    %v1516 = vadd.f32 %v1292, %v1515
    %1517 = vmatprep.mubr.bf16.mxu0 0
    %1518 = vmatmul.mubr.bf16.gmra.mxu0 %v1246
    %v1519 = vpop.f32.mrf.mxu0
    %v1520 = vadd.f32 %v1288, %v1519
    %v1521 = vpop.f32.mrf.mxu0
    %v1522 = vadd.f32 %v1292, %v1521
    %v1523 = vpop.f32.mrf.mxu0
    %v1524 = vadd.f32 %v1288, %v1523
    %v1525 = vpop.f32.mrf.mxu0
    %v1526 = vadd.f32 %v1292, %v1525
    %1527 = vmatprep.mubr.bf16.mxu0 0
    %1528 = vmatmul.mubr.bf16.gmra.mxu0 %v1247
    %v1529 = vpop.f32.mrf.mxu0
    %v1530 = vadd.f32 %v1288, %v1529
    %v1531 = vpop.f32.mrf.mxu0
    %v1532 = vadd.f32 %v1292, %v1531
    %v1533 = vpop.f32.mrf.mxu0
    %v1534 = vadd.f32 %v1288, %v1533
    %v1535 = vpop.f32.mrf.mxu0
    %v1536 = vadd.f32 %v1292, %v1535
    %1537 = vmatprep.mubr.bf16.mxu0 0
    %1538 = vmatmul.mubr.bf16.gmra.mxu0 %v1248
    %v1539 = vpop.f32.mrf.mxu0
    %v1540 = vadd.f32 %v1288, %v1539
    %v1541 = vpop.f32.mrf.mxu0
    %v1542 = vadd.f32 %v1292, %v1541
    %v1543 = vpop.f32.mrf.mxu0
    %v1544 = vadd.f32 %v1288, %v1543
    %v1545 = vpop.f32.mrf.mxu0
    %v1546 = vadd.f32 %v1292, %v1545
    %1547 = vmatprep.mubr.bf16.mxu0 0
    %1548 = vmatmul.mubr.bf16.gmra.mxu0 %v1249
    %v1549 = vpop.f32.mrf.mxu0
    %v1550 = vadd.f32 %v1288, %v1549
    %v1551 = vpop.f32.mrf.mxu0
    %v1552 = vadd.f32 %v1292, %v1551
    %v1553 = vpop.f32.mrf.mxu0
    %v1554 = vadd.f32 %v1288, %v1553
    %v1555 = vpop.f32.mrf.mxu0
    %v1556 = vadd.f32 %v1292, %v1555
    %1557 = vmatprep.mubr.bf16.mxu0 0
    %1558 = vmatmul.mubr.bf16.gmra.mxu0 %v1250
    %v1559 = vpop.f32.mrf.mxu0
    %v1560 = vadd.f32 %v1288, %v1559
    %v1561 = vpop.f32.mrf.mxu0
    %v1562 = vadd.f32 %v1292, %v1561
    %v1563 = vpop.f32.mrf.mxu0
    %v1564 = vadd.f32 %v1288, %v1563
    %v1565 = vpop.f32.mrf.mxu0
    %v1566 = vadd.f32 %v1292, %v1565
    %1567 = vmatprep.mubr.bf16.mxu0 0
    %1568 = vmatmul.mubr.bf16.gmra.mxu0 %v1251
    %v1569 = vpop.f32.mrf.mxu0
    %v1570 = vadd.f32 %v1288, %v1569
    %v1571 = vpop.f32.mrf.mxu0
    %v1572 = vadd.f32 %v1292, %v1571
    %v1573 = vpop.f32.mrf.mxu0
    %v1574 = vadd.f32 %v1288, %v1573
    %v1575 = vpop.f32.mrf.mxu0
    %v1576 = vadd.f32 %v1292, %v1575
    %1577 = vmatprep.mubr.bf16.mxu0 0
    %1578 = vmatmul.mubr.bf16.gmra.mxu0 %v1252
    %v1579 = vpop.f32.mrf.mxu0
    %v1580 = vadd.f32 %v1288, %v1579
    %v1581 = vpop.f32.mrf.mxu0
    %v1582 = vadd.f32 %v1292, %v1581
    %v1583 = vpop.f32.mrf.mxu0
    %v1584 = vadd.f32 %v1288, %v1583
    %v1585 = vpop.f32.mrf.mxu0
    %v1586 = vadd.f32 %v1292, %v1585
    %1587 = vmatprep.mubr.bf16.mxu0 0
    %1588 = vmatmul.mubr.bf16.gmra.mxu0 %v1253
    %v1589 = vpop.f32.mrf.mxu0
    %v1590 = vadd.f32 %v1288, %v1589
    %v1591 = vpop.f32.mrf.mxu0
    %v1592 = vadd.f32 %v1292, %v1591
    %v1593 = vpop.f32.mrf.mxu0
    %v1594 = vadd.f32 %v1288, %v1593
    %v1595 = vpop.f32.mrf.mxu0
    %v1596 = vadd.f32 %v1292, %v1595
    %1597 = vmatprep.mubr.bf16.mxu0 0
    %1598 = vmatmul.mubr.bf16.gmra.mxu0 %v1254
    %v1599 = vpop.f32.mrf.mxu0
    %v1600 = vadd.f32 %v1288, %v1599
    %v1601 = vpop.f32.mrf.mxu0
    %v1602 = vadd.f32 %v1292, %v1601
    %v1603 = vpop.f32.mrf.mxu0
    %v1604 = vadd.f32 %v1288, %v1603
    %v1605 = vpop.f32.mrf.mxu0
    %v1606 = vadd.f32 %v1292, %v1605
    %1607 = vmatprep.mubr.bf16.mxu0 0
    %1608 = vmatmul.mubr.bf16.gmra.mxu0 %v1255
    %v1609 = vpop.f32.mrf.mxu0
    %v1610 = vadd.f32 %v1288, %v1609
    %v1611 = vpop.f32.mrf.mxu0
    %v1612 = vadd.f32 %v1292, %v1611
    %v1613 = vpop.f32.mrf.mxu0
    %v1614 = vadd.f32 %v1288, %v1613
    %v1615 = vpop.f32.mrf.mxu0
    %v1616 = vadd.f32 %v1292, %v1615
    %1617 = vmatprep.mubr.bf16.mxu0 0
    %1618 = vmatmul.mubr.bf16.gmra.mxu0 %v1256
    %v1619 = vpop.f32.mrf.mxu0
    %v1620 = vadd.f32 %v1288, %v1619
    %v1621 = vpop.f32.mrf.mxu0
    %v1622 = vadd.f32 %v1292, %v1621
    %v1623 = vpop.f32.mrf.mxu0
    %v1624 = vadd.f32 %v1288, %v1623
    %v1625 = vpop.f32.mrf.mxu0
    %v1626 = vadd.f32 %v1292, %v1625
    %1627 = vmatprep.mubr.bf16.mxu0 0
    %1628 = vmatmul.mubr.bf16.gmra.mxu0 %v1257
    %v1629 = vpop.f32.mrf.mxu0
    %v1630 = vadd.f32 %v1288, %v1629
    %v1631 = vpop.f32.mrf.mxu0
    %v1632 = vadd.f32 %v1292, %v1631
    %v1633 = vpop.f32.mrf.mxu0
    %v1634 = vadd.f32 %v1288, %v1633
    %v1635 = vpop.f32.mrf.mxu0
    %v1636 = vadd.f32 %v1292, %v1635
    %1637 = vmatprep.mubr.bf16.mxu0 0
    %1638 = vmatmul.mubr.bf16.gmra.mxu0 %v1258
    %v1639 = vpop.f32.mrf.mxu0
    %v1640 = vadd.f32 %v1288, %v1639
    %v1641 = vpop.f32.mrf.mxu0
    %v1642 = vadd.f32 %v1292, %v1641
    %v1643 = vpop.f32.mrf.mxu0
    %v1644 = vadd.f32 %v1288, %v1643
    %v1645 = vpop.f32.mrf.mxu0
    %v1646 = vadd.f32 %v1292, %v1645
    %1647 = vmatprep.mubr.bf16.mxu0 0
    %1648 = vmatmul.mubr.bf16.gmra.mxu0 %v1259
    %v1649 = vpop.f32.mrf.mxu0
    %v1650 = vadd.f32 %v1288, %v1649
    %v1651 = vpop.f32.mrf.mxu0
    %v1652 = vadd.f32 %v1292, %v1651
    %v1653 = vpop.f32.mrf.mxu0
    %v1654 = vadd.f32 %v1288, %v1653
    %v1655 = vpop.f32.mrf.mxu0
    %v1656 = vadd.f32 %v1292, %v1655
    %1657 = vmatprep.mubr.bf16.mxu0 0
    %1658 = vmatmul.mubr.bf16.gmra.mxu0 %v1260
    %v1659 = vpop.f32.mrf.mxu0
    %v1660 = vadd.f32 %v1288, %v1659
    %v1661 = vpop.f32.mrf.mxu0
    %v1662 = vadd.f32 %v1292, %v1661
    %v1663 = vpop.f32.mrf.mxu0
    %v1664 = vadd.f32 %v1288, %v1663
    %v1665 = vpop.f32.mrf.mxu0
    %v1666 = vadd.f32 %v1292, %v1665
    %1667 = vmatprep.mubr.bf16.mxu0 0
    %1668 = vmatmul.mubr.bf16.gmra.mxu0 %v1261
    %v1669 = vpop.f32.mrf.mxu0
    %v1670 = vadd.f32 %v1288, %v1669
    %v1671 = vpop.f32.mrf.mxu0
    %v1672 = vadd.f32 %v1292, %v1671
    %v1673 = vpop.f32.mrf.mxu0
    %v1674 = vadd.f32 %v1288, %v1673
    %v1675 = vpop.f32.mrf.mxu0
    %v1676 = vadd.f32 %v1292, %v1675
    %1677 = vmatprep.mubr.bf16.mxu0 0
    %1678 = vmatmul.mubr.bf16.gmra.mxu0 %v1262
    %v1679 = vpop.f32.mrf.mxu0
    %v1680 = vadd.f32 %v1288, %v1679
    %v1681 = vpop.f32.mrf.mxu0
    %v1682 = vadd.f32 %v1292, %v1681
    %v1683 = vpop.f32.mrf.mxu0
    %v1684 = vadd.f32 %v1288, %v1683
    %v1685 = vpop.f32.mrf.mxu0
    %v1686 = vadd.f32 %v1292, %v1685
    %1687 = vmatprep.mubr.bf16.mxu0 0
    %1688 = vmatmul.mubr.bf16.gmra.mxu0 %v1263
    %v1689 = vpop.f32.mrf.mxu0
    %v1690 = vadd.f32 %v1288, %v1689
    %v1691 = vpop.f32.mrf.mxu0
    %v1692 = vadd.f32 %v1292, %v1691
    %v1693 = vpop.f32.mrf.mxu0
    %v1694 = vadd.f32 %v1288, %v1693
    %v1695 = vpop.f32.mrf.mxu0
    %v1696 = vadd.f32 %v1292, %v1695
    %1697 = vmatprep.mubr.bf16.mxu0 0
    %1698 = vmatmul.mubr.bf16.gmra.mxu0 %v1264
    %v1699 = vpop.f32.mrf.mxu0
    %v1700 = vadd.f32 %v1288, %v1699
    %v1701 = vpop.f32.mrf.mxu0
    %v1702 = vadd.f32 %v1292, %v1701
    %v1703 = vpop.f32.mrf.mxu0
    %v1704 = vadd.f32 %v1288, %v1703
    %v1705 = vpop.f32.mrf.mxu0
    %v1706 = vadd.f32 %v1292, %v1705
    %1707 = vmatprep.mubr.bf16.mxu0 0
    %1708 = vmatmul.mubr.bf16.gmra.mxu0 %v1265
    %v1709 = vpop.f32.mrf.mxu0
    %v1710 = vadd.f32 %v1288, %v1709
    %v1711 = vpop.f32.mrf.mxu0
    %v1712 = vadd.f32 %v1292, %v1711
    %v1713 = vpop.f32.mrf.mxu0
    %v1714 = vadd.f32 %v1288, %v1713
    %v1715 = vpop.f32.mrf.mxu0
    %v1716 = vadd.f32 %v1292, %v1715
    %1717 = vmatprep.mubr.bf16.mxu0 0
    %1718 = vmatmul.mubr.bf16.gmra.mxu0 %v1266
    %v1719 = vpop.f32.mrf.mxu0
    %v1720 = vadd.f32 %v1288, %v1719
    %v1721 = vpop.f32.mrf.mxu0
    %v1722 = vadd.f32 %v1292, %v1721
    %v1723 = vpop.f32.mrf.mxu0
    %v1724 = vadd.f32 %v1288, %v1723
    %v1725 = vpop.f32.mrf.mxu0
    %v1726 = vadd.f32 %v1292, %v1725
    %1727 = vdwg.mxu0
    %v1728 = vmax.f32 %v1410, %v1414
    %v1729 = vmax.f32 %v1728, %v1420
    %v1730 = vmax.f32 %v1729, %v1424
    %v1731 = vmax.f32 %v1730, %v1430
    %v1732 = vmax.f32 %v1731, %v1434
    %v1733 = vmax.f32 %v1732, %v1440
    %v1734 = vmax.f32 %v1733, %v1444
    %v1735 = vrot.slane %v1734, 4
    %v1736 = vmax.f32 %v1734, %v1735
    %v1737 = vrot.slane %v1736, 2
    %v1738 = vmax.f32 %v1736, %v1737
    %v1739 = vrot.slane %v1738, 1
    %v1740 = vmax.f32 %v1738, %v1739
    %v1741 = vmax.f32 %v1412, %v1416
    %v1742 = vmax.f32 %v1741, %v1422
    %v1743 = vmax.f32 %v1742, %v1426
    %v1744 = vmax.f32 %v1743, %v1432
    %v1745 = vmax.f32 %v1744, %v1436
    %v1746 = vmax.f32 %v1745, %v1442
    %v1747 = vmax.f32 %v1746, %v1446
    %v1748 = vrot.slane %v1747, 4
    %v1749 = vmax.f32 %v1747, %v1748
    %v1750 = vrot.slane %v1749, 2
    %v1751 = vmax.f32 %v1749, %v1750
    %v1752 = vrot.slane %v1751, 1
    %v1753 = vmax.f32 %v1751, %v1752
    %v1754 = vmax.f32 %v1450, %v1454
    %v1755 = vmax.f32 %v1754, %v1460
    %v1756 = vmax.f32 %v1755, %v1464
    %v1757 = vmax.f32 %v1756, %v1470
    %v1758 = vmax.f32 %v1757, %v1474
    %v1759 = vmax.f32 %v1758, %v1480
    %v1760 = vmax.f32 %v1759, %v1484
    %v1761 = vrot.slane %v1760, 4
    %v1762 = vmax.f32 %v1760, %v1761
    %v1763 = vrot.slane %v1762, 2
    %v1764 = vmax.f32 %v1762, %v1763
    %v1765 = vrot.slane %v1764, 1
    %v1766 = vmax.f32 %v1764, %v1765
    %v1767 = vmax.f32 %v1452, %v1456
    %v1768 = vmax.f32 %v1767, %v1462
    %v1769 = vmax.f32 %v1768, %v1466
    %v1770 = vmax.f32 %v1769, %v1472
    %v1771 = vmax.f32 %v1770, %v1476
    %v1772 = vmax.f32 %v1771, %v1482
    %v1773 = vmax.f32 %v1772, %v1486
    %v1774 = vrot.slane %v1773, 4
    %v1775 = vmax.f32 %v1773, %v1774
    %v1776 = vrot.slane %v1775, 2
    %v1777 = vmax.f32 %v1775, %v1776
    %v1778 = vrot.slane %v1777, 1
    %v1779 = vmax.f32 %v1777, %v1778
    %v1780 = vmax.f32 %v1490, %v1494
    %v1781 = vmax.f32 %v1780, %v1500
    %v1782 = vmax.f32 %v1781, %v1504
    %v1783 = vmax.f32 %v1782, %v1510
    %v1784 = vmax.f32 %v1783, %v1514
    %v1785 = vmax.f32 %v1784, %v1520
    %v1786 = vmax.f32 %v1785, %v1524
    %v1787 = vrot.slane %v1786, 4
    %v1788 = vmax.f32 %v1786, %v1787
    %v1789 = vrot.slane %v1788, 2
    %v1790 = vmax.f32 %v1788, %v1789
    %v1791 = vrot.slane %v1790, 1
    %v1792 = vmax.f32 %v1790, %v1791
    %v1793 = vmax.f32 %v1492, %v1496
    %v1794 = vmax.f32 %v1793, %v1502
    %v1795 = vmax.f32 %v1794, %v1506
    %v1796 = vmax.f32 %v1795, %v1512
    %v1797 = vmax.f32 %v1796, %v1516
    %v1798 = vmax.f32 %v1797, %v1522
    %v1799 = vmax.f32 %v1798, %v1526
    %v1800 = vrot.slane %v1799, 4
    %v1801 = vmax.f32 %v1799, %v1800
    %v1802 = vrot.slane %v1801, 2
    %v1803 = vmax.f32 %v1801, %v1802
    %v1804 = vrot.slane %v1803, 1
    %v1805 = vmax.f32 %v1803, %v1804
    %v1806 = vmax.f32 %v1530, %v1534
    %v1807 = vmax.f32 %v1806, %v1540
    %v1808 = vmax.f32 %v1807, %v1544
    %v1809 = vmax.f32 %v1808, %v1550
    %v1810 = vmax.f32 %v1809, %v1554
    %v1811 = vmax.f32 %v1810, %v1560
    %v1812 = vmax.f32 %v1811, %v1564
    %v1813 = vrot.slane %v1812, 4
    %v1814 = vmax.f32 %v1812, %v1813
    %v1815 = vrot.slane %v1814, 2
    %v1816 = vmax.f32 %v1814, %v1815
    %v1817 = vrot.slane %v1816, 1
    %v1818 = vmax.f32 %v1816, %v1817
    %v1819 = vmax.f32 %v1532, %v1536
    %v1820 = vmax.f32 %v1819, %v1542
    %v1821 = vmax.f32 %v1820, %v1546
    %v1822 = vmax.f32 %v1821, %v1552
    %v1823 = vmax.f32 %v1822, %v1556
    %v1824 = vmax.f32 %v1823, %v1562
    %v1825 = vmax.f32 %v1824, %v1566
    %v1826 = vrot.slane %v1825, 4
    %v1827 = vmax.f32 %v1825, %v1826
    %v1828 = vrot.slane %v1827, 2
    %v1829 = vmax.f32 %v1827, %v1828
    %v1830 = vrot.slane %v1829, 1
    %v1831 = vmax.f32 %v1829, %v1830
    %v1832 = vmax.f32 %v1570, %v1574
    %v1833 = vmax.f32 %v1832, %v1580
    %v1834 = vmax.f32 %v1833, %v1584
    %v1835 = vmax.f32 %v1834, %v1590
    %v1836 = vmax.f32 %v1835, %v1594
    %v1837 = vmax.f32 %v1836, %v1600
    %v1838 = vmax.f32 %v1837, %v1604
    %v1839 = vrot.slane %v1838, 4
    %v1840 = vmax.f32 %v1838, %v1839
    %v1841 = vrot.slane %v1840, 2
    %v1842 = vmax.f32 %v1840, %v1841
    %v1843 = vrot.slane %v1842, 1
    %v1844 = vmax.f32 %v1842, %v1843
    %v1845 = vmax.f32 %v1572, %v1576
    %v1846 = vmax.f32 %v1845, %v1582
    %v1847 = vmax.f32 %v1846, %v1586
    %v1848 = vmax.f32 %v1847, %v1592
    %v1849 = vmax.f32 %v1848, %v1596
    %v1850 = vmax.f32 %v1849, %v1602
    %v1851 = vmax.f32 %v1850, %v1606
    %v1852 = vrot.slane %v1851, 4
    %v1853 = vmax.f32 %v1851, %v1852
    %v1854 = vrot.slane %v1853, 2
    %v1855 = vmax.f32 %v1853, %v1854
    %v1856 = vrot.slane %v1855, 1
    %v1857 = vmax.f32 %v1855, %v1856
    %v1858 = vmax.f32 %v1610, %v1614
    %v1859 = vmax.f32 %v1858, %v1620
    %v1860 = vmax.f32 %v1859, %v1624
    %v1861 = vmax.f32 %v1860, %v1630
    %v1862 = vmax.f32 %v1861, %v1634
    %v1863 = vmax.f32 %v1862, %v1640
    %v1864 = vmax.f32 %v1863, %v1644
    %v1865 = vrot.slane %v1864, 4
    %v1866 = vmax.f32 %v1864, %v1865
    %v1867 = vrot.slane %v1866, 2
    %v1868 = vmax.f32 %v1866, %v1867
    %v1869 = vrot.slane %v1868, 1
    %v1870 = vmax.f32 %v1868, %v1869
    %v1871 = vmax.f32 %v1612, %v1616
    %v1872 = vmax.f32 %v1871, %v1622
    %v1873 = vmax.f32 %v1872, %v1626
    %v1874 = vmax.f32 %v1873, %v1632
    %v1875 = vmax.f32 %v1874, %v1636
    %v1876 = vmax.f32 %v1875, %v1642
    %v1877 = vmax.f32 %v1876, %v1646
    %v1878 = vrot.slane %v1877, 4
    %v1879 = vmax.f32 %v1877, %v1878
    %v1880 = vrot.slane %v1879, 2
    %v1881 = vmax.f32 %v1879, %v1880
    %v1882 = vrot.slane %v1881, 1
    %v1883 = vmax.f32 %v1881, %v1882
    %v1884 = vmax.f32 %v1650, %v1654
    %v1885 = vmax.f32 %v1884, %v1660
    %v1886 = vmax.f32 %v1885, %v1664
    %v1887 = vmax.f32 %v1886, %v1670
    %v1888 = vmax.f32 %v1887, %v1674
    %v1889 = vmax.f32 %v1888, %v1680
    %v1890 = vmax.f32 %v1889, %v1684
    %v1891 = vrot.slane %v1890, 4
    %v1892 = vmax.f32 %v1890, %v1891
    %v1893 = vrot.slane %v1892, 2
    %v1894 = vmax.f32 %v1892, %v1893
    %v1895 = vrot.slane %v1894, 1
    %v1896 = vmax.f32 %v1894, %v1895
    %v1897 = vmax.f32 %v1652, %v1656
    %v1898 = vmax.f32 %v1897, %v1662
    %v1899 = vmax.f32 %v1898, %v1666
    %v1900 = vmax.f32 %v1899, %v1672
    %v1901 = vmax.f32 %v1900, %v1676
    %v1902 = vmax.f32 %v1901, %v1682
    %v1903 = vmax.f32 %v1902, %v1686
    %v1904 = vrot.slane %v1903, 4
    %v1905 = vmax.f32 %v1903, %v1904
    %v1906 = vrot.slane %v1905, 2
    %v1907 = vmax.f32 %v1905, %v1906
    %v1908 = vrot.slane %v1907, 1
    %v1909 = vmax.f32 %v1907, %v1908
    %v1910 = vmax.f32 %v1690, %v1694
    %v1911 = vmax.f32 %v1910, %v1700
    %v1912 = vmax.f32 %v1911, %v1704
    %v1913 = vmax.f32 %v1912, %v1710
    %v1914 = vmax.f32 %v1913, %v1714
    %v1915 = vmax.f32 %v1914, %v1720
    %v1916 = vmax.f32 %v1915, %v1724
    %v1917 = vrot.slane %v1916, 4
    %v1918 = vmax.f32 %v1916, %v1917
    %v1919 = vrot.slane %v1918, 2
    %v1920 = vmax.f32 %v1918, %v1919
    %v1921 = vrot.slane %v1920, 1
    %v1922 = vmax.f32 %v1920, %v1921
    %v1923 = vmax.f32 %v1692, %v1696
    %v1924 = vmax.f32 %v1923, %v1702
    %v1925 = vmax.f32 %v1924, %v1706
    %v1926 = vmax.f32 %v1925, %v1712
    %v1927 = vmax.f32 %v1926, %v1716
    %v1928 = vmax.f32 %v1927, %v1722
    %v1929 = vmax.f32 %v1928, %v1726
    %v1930 = vrot.slane %v1929, 4
    %v1931 = vmax.f32 %v1929, %v1930
    %v1932 = vrot.slane %v1931, 2
    %v1933 = vmax.f32 %v1931, %v1932
    %v1934 = vrot.slane %v1933, 1
    %v1935 = vmax.f32 %v1933, %v1934
    %vm1952 = vcmask 1041409
    %v1953 = vsel %vm1952, %v1766, %v1740
    %vm1954 = vcmask 1042434
    %v1955 = vsel %vm1954, %v1792, %v1953
    %vm1956 = vcmask 1043459
    %v1957 = vsel %vm1956, %v1818, %v1955
    %vm1958 = vcmask 1044484
    %v1959 = vsel %vm1958, %v1844, %v1957
    %vm1960 = vcmask 1045509
    %v1961 = vsel %vm1960, %v1870, %v1959
    %vm1962 = vcmask 1046534
    %v1963 = vsel %vm1962, %v1896, %v1961
    %vm1964 = vcmask 1047559
    %v1965 = vsel %vm1964, %v1922, %v1963
    %v1966 = vsel %vm1952, %v1779, %v1753
    %v1967 = vsel %vm1954, %v1805, %v1966
    %v1968 = vsel %vm1956, %v1831, %v1967
    %v1969 = vsel %vm1958, %v1857, %v1968
    %v1970 = vsel %vm1960, %v1883, %v1969
    %v1971 = vsel %vm1962, %v1909, %v1970
    %v1972 = vsel %vm1964, %v1935, %v1971
    %1975 = vst [vmem:[#allocation2] sm:$0xff] %v1965
    %1976 = vst [vmem:[#allocation2 + $0x8] sm:$0xff] %v1972
    // Predicated region
    $region30: #{tpu_custom_call.1} parent=1 // pred_check
      _
    $region31: #{tpu_custom_call.1} parent=1 // pred_check_branch
      %1978 = sbr.rel (0) target = $region33
    $region32: #{tpu_custom_call.1} parent=1 // pred_region
      %s1980 = ssub.s32 256, 256
      %1981 = vsyncadd [#allocation3], %s1980
      %s1983 = sshll.u32 [#allocation2], 4
      %s1984 = int_to_ptr.vmem [resolvable:$true] %s1983
      %1986 = dma.vmem_to_hbm [thread:$0]  %s1984, 256, %s7, [#allocation3]
    $region33: #{tpu_custom_call.1} parent=1 // pred_fallthru
      _
    // Predicated region
    $region34: #{tpu_custom_call.1} parent=1 // pred_check
      _
    $region35: #{tpu_custom_call.1} parent=1 // pred_check_branch
      %1988 = sbr.rel (0) target = $region37
    $region36: #{tpu_custom_call.1} parent=1 // pred_region
      %1989 = dma.done [#allocation3], 256
    $region37: #{tpu_custom_call.1} parent=1 // pred_fallthru
      _
    %1990 = vsyncpa [#allocation3], 1

</llo_original>
